<compile_context>
chip_gen: v7x
topology: tpu7x:2x2x1
jax: 0.10.0
libtpu: 0.0.40
codegen_flags: <defaults>
</compile_context>

<pallas_src>
import functools

import jax
import jax.numpy as jnp
from jax import lax
from jax.experimental import pallas as pl
from jax.experimental.pallas import tpu as pltpu

NEG_SLOPE = 0.2     # PyG GATConv default LeakyReLU slope
NUM_LAYERS = 4      # conv1..conv4
FP = 128            # padded feature width (lane-dense)


def _full_spec(shape):
    rank = len(shape)
    return pl.BlockSpec(shape, lambda i, _r=rank: (0,) * _r)


# ---------------------------------------------------------------------------
# Fused kernel: 4x GATConv(+ReLU) -> global_mean_pool -> fc1 -> ReLU -> fc2
# ---------------------------------------------------------------------------
def fused_gat_kernel(x_ref, adj_ref, w_ref, csrc_ref, bias_ref, pool_ref,
                     w1_ref, b1_ref, w2_ref, b2_ref, out_ref, h_ref, *, nd):
    # x [Np, FP] f32 ; adj [nd, Np] f32 mask ; w [L, FP, FP] bf16 (col FP-1 = W @ att_dst^T)
    # csrc [L, FP] f32 (row l = att_src_l @ W_l^T) ; bias [L, FP] f32
    # pool [Gp, Np] f32 ; w1/w2 [FP, FP] bf16 ; b1/b2 [1, FP] f32 ; out [Gp, FP] f32
    # h_ref [Np, FP] f32 scratch: activation carried across layers (rows nd..Np stay zero).
    mask = adj_ref[...] > 0.0                                 # [nd, Np], computed once, reused 4x
    csrc_all = csrc_ref[...].astype(jnp.bfloat16)             # [L, FP]
    bias_all = bias_ref[...]                                  # [L, FP] f32

    h_ref[...] = x_ref[...]                                   # zero-padded activations
    for l in range(NUM_LAYERS):
        hb = h_ref[...].astype(jnp.bfloat16)                  # [Np, FP]
        # Linear transform with the dst-attention projection folded in:
        #   hz[:, :Fo] = h @ W     hz[:, FP-1] = (h @ W) @ att_dst^T
        hz = jnp.dot(hb, w_ref[l], preferred_element_type=jnp.float32)      # [Np, FP]
        a_dst = hz[:nd, FP - 1:FP]                                          # [nd, 1]
        a_src = lax.dot_general(csrc_all[l:l + 1, :], hb,
                                (((1,), (1,)), ((), ())),
                                preferred_element_type=jnp.float32)         # [1, Np]

        s = a_dst + a_src                                                   # [nd, Np]
        # Fused LeakyReLU(0.2) + adjacency mask (single select).
        masked = jnp.where(mask, jnp.where(s > 0, s, NEG_SLOPE * s), -1e30)
        m = jnp.max(masked, axis=1, keepdims=True)
        e = jnp.exp(masked - m)                              # masked entries underflow to 0
        denom = jnp.maximum(jnp.sum(e, axis=1, keepdims=True), 1e-20)
        attn = e * pl.reciprocal(denom, approx=True)         # edge softmax per dst row

        agg = jnp.dot(attn.astype(jnp.bfloat16), hz.astype(jnp.bfloat16),
                      preferred_element_type=jnp.float32)    # [nd, FP]
        h_ref[:nd, :] = jnp.maximum(agg + bias_all[l:l + 1, :], 0.0)        # bias + .relu()

    # Head: global_mean_pool (pool matmul) + fc1 + ReLU + dropout(eval) + fc2
    hb = h_ref[...].astype(jnp.bfloat16)
    pooled = jnp.dot(pool_ref[...].astype(jnp.bfloat16), hb,
                     preferred_element_type=jnp.float32)                    # [Gp, FP]
    z = jnp.dot(pooled.astype(jnp.bfloat16), w1_ref[...],
                preferred_element_type=jnp.float32) + b1_ref[...]
    z = jnp.maximum(z, 0.0)
    # TODO(synk): F.dropout(p=0.5) is identity in eval mode; training-mode RNG mask not implemented.
    out_ref[...] = jnp.dot(z.astype(jnp.bfloat16), w2_ref[...],
                           preferred_element_type=jnp.float32) + b2_ref[...]


# ---------------------------------------------------------------------------
# One-time preprocessing (hoisted out of the forward path per perf review).
# ---------------------------------------------------------------------------
def prepare_gat(params, edge_index, batch, num_graphs, num_nodes):
    n = num_nodes
    out_c = params["fc2"]["w"].shape[1]
    n_pad = max(FP, -(-n // FP) * FP)                 # lane-dense node axis (src/lane)
    nd = min(n_pad, max(16, -(-n // 16) * 16))        # dst (sublane) axis, trimmed
    g_pad = max(8, -(-num_graphs // 8) * 8)           # sublane-aligned head rows

    # Dense adjacency mask adj[dst, src] with self-loops (add_self_loops=True).
    src, dst = edge_index[0], edge_index[1]
    adj = jnp.zeros((nd, n_pad), jnp.float32).at[dst, src].set(1.0)
    diag = jnp.arange(n)
    adj = adj.at[diag, diag].set(1.0)

    # Per-layer padded weights with the attention projections folded in.
    w_l, c_l, b_l = [], [], []
    for name in ("conv1", "conv2", "conv3", "conv4"):
        p = params[name]
        w = p["w"]
        fi, fo = w.shape
        assert fi <= FP and fo < FP - 1, "feature dims must fit padded width (stash col FP-1)"
        wp = jnp.zeros((FP, FP), jnp.float32)
        wp = wp.at[:fi, :fo].set(w)
        wp = wp.at[:fi, FP - 1].set((w @ p["att_dst"].T)[:, 0])     # folded dst projection
        w_l.append(wp)
        c_l.append(jnp.zeros((FP,), jnp.float32).at[:fi].set((p["att_src"] @ w.T)[0]))
        b_l.append(jnp.zeros((FP,), jnp.float32).at[:fo].set(p["bias"][0]))
    w_stack = jnp.stack(w_l).astype(jnp.bfloat16)      # [4, FP, FP]
    csrc_stack = jnp.stack(c_l)                        # [4, FP] f32
    bias_stack = jnp.stack(b_l)                        # [4, FP] f32

    # global_mean_pool as a [G_pad, N_pad] pooling matrix (zero-padded rows/cols).
    one_hot = (batch[None, :] == jnp.arange(num_graphs)[:, None]).astype(jnp.float32)
    counts = jnp.maximum(one_hot.sum(axis=1, keepdims=True), 1.0)
    pool = jnp.zeros((g_pad, n_pad), jnp.float32).at[:num_graphs, :n].set(one_hot / counts)

    w1 = params["fc1"]["w"]; b1 = params["fc1"]["b"]
    w2 = params["fc2"]["w"]; b2 = params["fc2"]["b"]
    w1p = jnp.zeros((FP, FP), jnp.float32).at[:w1.shape[0], :w1.shape[1]].set(w1).astype(jnp.bfloat16)
    b1p = jnp.zeros((1, FP), jnp.float32).at[:, :b1.shape[1]].set(b1)
    w2p = jnp.zeros((FP, FP), jnp.float32).at[:w2.shape[0], :w2.shape[1]].set(w2).astype(jnp.bfloat16)
    b2p = jnp.zeros((1, FP), jnp.float32).at[:, :b2.shape[1]].set(b2)

    tensors = dict(adj=adj, w=w_stack, csrc=csrc_stack, bias=bias_stack, pool=pool,
                   w1=w1p, b1=b1p, w2=w2p, b2=b2p)
    info = dict(nd=nd, n_pad=n_pad, g_pad=g_pad, num_graphs=num_graphs, out_c=out_c)
    return tensors, info


# ---------------------------------------------------------------------------
# Forward: pad x (only per-call op) and launch the single fused pallas_call.
# ---------------------------------------------------------------------------
def gat_forward(x, tensors, *, nd, n_pad, g_pad, num_graphs, out_c):
    n, in_c = x.shape
    x_pad = jnp.zeros((n_pad, FP), jnp.float32).at[:n, :in_c].set(x)

    # Advisory cost estimate: tiny, latency-bound kernel.
    flops = (NUM_LAYERS * (2 * n_pad * FP * FP + 2 * n_pad * FP + 2 * nd * n_pad * FP)
             + 2 * g_pad * n_pad * FP + 2 * 2 * g_pad * FP * FP)
    bytes_accessed = sum(int(t.size) * t.dtype.itemsize for t in tensors.values())
    bytes_accessed += x_pad.size * 4 + g_pad * FP * 4
    cost = pl.CostEstimate(flops=flops,
                           transcendentals=NUM_LAYERS * nd * n_pad,
                           bytes_accessed=bytes_accessed)

    kernel = functools.partial(fused_gat_kernel, nd=nd)
    # TODO(synk): for large N, tile the dst-node axis as a "parallel" grid dim
    # (softmax is per-dst-row) to use v7x's second TensorCore; at N=16 a single
    # block is optimal (per-grid-step overhead exceeds the compute).
    out_pad = pl.pallas_call(
        kernel,
        grid=(1,),
        in_specs=[_full_spec(x_pad.shape), _full_spec(tensors["adj"].shape),
                  _full_spec(tensors["w"].shape), _full_spec(tensors["csrc"].shape),
                  _full_spec(tensors["bias"].shape), _full_spec(tensors["pool"].shape),
                  _full_spec(tensors["w1"].shape), _full_spec(tensors["b1"].shape),
                  _full_spec(tensors["w2"].shape), _full_spec(tensors["b2"].shape)],
        out_specs=_full_spec((g_pad, FP)),
        out_shape=jax.ShapeDtypeStruct((g_pad, FP), jnp.float32),
        scratch_shapes=[pltpu.VMEM((n_pad, FP), jnp.float32)],
        compiler_params=pltpu.CompilerParams(
            dimension_semantics=("arbitrary",),
            vmem_limit_bytes=8 * 1024 * 1024),
        cost_estimate=cost,
    )(x_pad, tensors["adj"], tensors["w"], tensors["csrc"], tensors["bias"],
      tensors["pool"], tensors["w1"], tensors["b1"], tensors["w2"], tensors["b2"])

    return out_pad[:num_graphs, :out_c]


def init_params(key, in_channels, hidden_channels, out_channels):
    ks = jax.random.split(key, 16)
    i = iter(range(16))

    def gat_layer(fi, fo):
        return dict(
            w=jax.random.normal(ks[next(i)], (fi, fo), jnp.float32) * 0.1,
            att_src=jax.random.normal(ks[next(i)], (1, fo), jnp.float32) * 0.1,
            att_dst=jax.random.normal(ks[next(i)], (1, fo), jnp.float32) * 0.1,
            bias=jnp.zeros((1, fo), jnp.float32),
        )

    def linear(fi, fo):
        return dict(
            w=jax.random.normal(ks[next(i)], (fi, fo), jnp.float32) * 0.1,
            b=jnp.zeros((1, fo), jnp.float32),
        )

    return dict(
        conv1=gat_layer(in_channels, hidden_channels),
        conv2=gat_layer(hidden_channels, hidden_channels),
        conv3=gat_layer(hidden_channels, hidden_channels),
        conv4=gat_layer(hidden_channels, hidden_channels),
        fc1=linear(hidden_channels, hidden_channels),
        fc2=linear(hidden_channels, out_channels),
    )


if __name__ == "__main__":
    IN_C, HID_C, OUT_C = 8, 32, 4
    NODES_PER_GRAPH, NUM_GRAPHS = 8, 2
    N = NODES_PER_GRAPH * NUM_GRAPHS

    key = jax.random.PRNGKey(0)
    k_x, k_p = jax.random.split(key)

    x = jax.random.normal(k_x, (N, IN_C), jnp.float32)

    # deterministic bidirectional ring edges within each graph
    srcs, dsts = [], []
    for g in range(NUM_GRAPHS):
        base = g * NODES_PER_GRAPH
        for i in range(NODES_PER_GRAPH):
            a, b = base + i, base + (i + 1) % NODES_PER_GRAPH
            srcs += [a, b]
            dsts += [b, a]
    edge_index = jnp.array([srcs, dsts], dtype=jnp.int32)          # [2, 32]
    batch = jnp.repeat(jnp.arange(NUM_GRAPHS, dtype=jnp.int32), NODES_PER_GRAPH)

    params = init_params(k_p, IN_C, HID_C, OUT_C)

    # One-time preprocessing; padded/folded tensors are reused across forwards.
    tensors, info = prepare_gat(params, edge_index, batch, NUM_GRAPHS, N)
    tensors = jax.device_put(jax.tree_util.tree_map(jnp.asarray, tensors))

    fwd = jax.jit(functools.partial(gat_forward, **info))
    out = fwd(x, tensors)
    jax.block_until_ready(out)
    assert out.shape == (NUM_GRAPHS, OUT_C)
    assert jnp.all(jnp.isfinite(out))
    print("KERNEL_OK")
</pallas_src>

<mosaic_0001>
module attributes {stable_mosaic.version = 11 : i64} {
  func.func @fused_gat_kernel(%arg0: i32, %arg1: memref<128x128xf32, #tpu.memory_space<vmem>>, %arg2: memref<16x128xf32, #tpu.memory_space<vmem>>, %arg3: memref<4x128x128xbf16, #tpu.memory_space<vmem>>, %arg4: memref<4x128xf32, #tpu.memory_space<vmem>>, %arg5: memref<4x128xf32, #tpu.memory_space<vmem>>, %arg6: memref<8x128xf32, #tpu.memory_space<vmem>>, %arg7: memref<128x128xbf16, #tpu.memory_space<vmem>>, %arg8: memref<1x128xf32, #tpu.memory_space<vmem>>, %arg9: memref<128x128xbf16, #tpu.memory_space<vmem>>, %arg10: memref<1x128xf32, #tpu.memory_space<vmem>>, %arg11: memref<8x128xf32, #tpu.memory_space<vmem>>, %arg12: memref<128x128xf32, #tpu.memory_space<vmem>>) attributes {dimension_semantics = [#tpu.dimension_semantics<arbitrary>], iteration_bounds = array<i64: 1>, scalar_prefetch = 0 : i64, scratch_operands = 1 : i64, tpu.core_type = #tpu.core_type<tc>, window_params = [{pipeline_mode = #tpu.pipeline_mode<synchronous>, transform_indices = @transform_0, window_bounds = array<i64: 128, 128>}, {pipeline_mode = #tpu.pipeline_mode<synchronous>, transform_indices = @transform_1, window_bounds = array<i64: 16, 128>}, {pipeline_mode = #tpu.pipeline_mode<synchronous>, transform_indices = @transform_2, window_bounds = array<i64: 4, 128, 128>}, {pipeline_mode = #tpu.pipeline_mode<synchronous>, transform_indices = @transform_3, window_bounds = array<i64: 4, 128>}, {pipeline_mode = #tpu.pipeline_mode<synchronous>, transform_indices = @transform_4, window_bounds = array<i64: 4, 128>}, {pipeline_mode = #tpu.pipeline_mode<synchronous>, transform_indices = @transform_5, window_bounds = array<i64: 8, 128>}, {pipeline_mode = #tpu.pipeline_mode<synchronous>, transform_indices = @transform_6, window_bounds = array<i64: 128, 128>}, {pipeline_mode = #tpu.pipeline_mode<synchronous>, transform_indices = @transform_7, window_bounds = array<i64: 1, 128>}, {pipeline_mode = #tpu.pipeline_mode<synchronous>, transform_indices = @transform_8, window_bounds = array<i64: 128, 128>}, {pipeline_mode = #tpu.pipeline_mode<synchronous>, transform_indices = @transform_9, window_bounds = array<i64: 1, 128>}, {pipeline_mode = #tpu.pipeline_mode<synchronous>, transform_indices = @transform_10, window_bounds = array<i64: 8, 128>}]} {
    %c0 = arith.constant 0 : index
    %c0_0 = arith.constant 0 : index
    %0 = vector.load %arg2[%c0, %c0_0] : memref<16x128xf32, #tpu.memory_space<vmem>>, vector<16x128xf32>
    %cst = arith.constant 0.000000e+00 : f32
    %1 = vector.broadcast %cst : f32 to vector<16x128xf32>
    %2 = arith.cmpf ogt, %0, %1 : vector<16x128xf32>
    %c0_1 = arith.constant 0 : index
    %c0_2 = arith.constant 0 : index
    %3 = vector.load %arg4[%c0_1, %c0_2] : memref<4x128xf32, #tpu.memory_space<vmem>>, vector<4x128xf32>
    %4 = arith.truncf %3 : vector<4x128xf32> to vector<4x128xbf16>
    %c0_3 = arith.constant 0 : index
    %c0_4 = arith.constant 0 : index
    %5 = vector.load %arg5[%c0_3, %c0_4] : memref<4x128xf32, #tpu.memory_space<vmem>>, vector<4x128xf32>
    %c0_5 = arith.constant 0 : index
    %c0_6 = arith.constant 0 : index
    %6 = vector.load %arg1[%c0_5, %c0_6] : memref<128x128xf32, #tpu.memory_space<vmem>>, vector<128x128xf32>
    %c0_7 = arith.constant 0 : index
    %c0_8 = arith.constant 0 : index
    %7 = vector.load %arg12[%c0_7, %c0_8] : memref<128x128xf32, #tpu.memory_space<vmem>>, vector<128x128xf32>
    tpu.vector_store %arg12[%c0_7, %c0_8], %6 {strides = array<i32>} : memref<128x128xf32, #tpu.memory_space<vmem>>, vector<128x128xf32>,
    %c0_9 = arith.constant 0 : index
    %c0_10 = arith.constant 0 : index
    %8 = vector.load %arg12[%c0_9, %c0_10] : memref<128x128xf32, #tpu.memory_space<vmem>>, vector<128x128xf32>
    %9 = arith.truncf %8 : vector<128x128xf32> to vector<128x128xbf16>
    %c0_11 = arith.constant 0 : index
    %c0_12 = arith.constant 0 : index
    %c0_13 = arith.constant 0 : index
    %10 = vector.load %arg3[%c0_11, %c0_12, %c0_13] : memref<4x128x128xbf16, #tpu.memory_space<vmem>>, vector<1x128x128xbf16>
    %11 = vector.shape_cast %10 : vector<1x128x128xbf16> to vector<128x128xbf16>
    %cst_14 = arith.constant dense<0.000000e+00> : vector<128x128xf32>
    %12 = tpu.matmul %9, %11, %cst_14 {dimension_numbers = #tpu.dot_dimension_numbers<[1], [0], [0], [1], [0, 0, 1, 1], [], []>} : vector<128x128xbf16>, vector<128x128xbf16>, vector<128x128xf32> -> vector<128x128xf32>
    %13 = vector.extract_strided_slice %12 {offsets = [0, 127], sizes = [16, 1], strides = [1, 1]} : vector<128x128xf32> to vector<16x1xf32>
    %14 = vector.extract_strided_slice %4 {offsets = [0, 0], sizes = [1, 128], strides = [1, 1]} : vector<4x128xbf16> to vector<1x128xbf16>
    %cst_15 = arith.constant dense<0.000000e+00> : vector<1x128xf32>
    %15 = tpu.matmul %14, %9, %cst_15 {dimension_numbers = #tpu.dot_dimension_numbers<[1], [1], [0], [0], [0, 0, 1, 0], [], []>} : vector<1x128xbf16>, vector<128x128xbf16>, vector<1x128xf32> -> vector<1x128xf32>
    %16 = vector.broadcast %13 : vector<16x1xf32> to vector<16x128xf32>
    %17 = vector.broadcast %15 : vector<1x128xf32> to vector<16x128xf32>
    %18 = arith.addf %16, %17 : vector<16x128xf32>
    %cst_16 = arith.constant 0.000000e+00 : f32
    %19 = vector.broadcast %cst_16 : f32 to vector<16x128xf32>
    %20 = arith.cmpf ogt, %18, %19 : vector<16x128xf32>
    %cst_17 = arith.constant 2.000000e-01 : f32
    %21 = vector.broadcast %cst_17 : f32 to vector<16x128xf32>
    %22 = arith.mulf %21, %18 : vector<16x128xf32>
    %23 = arith.select %20, %18, %22 : vector<16x128xi1>, vector<16x128xf32>
    %cst_18 = arith.constant -1.000000e+30 : f32
    %24 = vector.broadcast %cst_18 : f32 to vector<16x128xf32>
    %25 = arith.select %2, %23, %24 : vector<16x128xi1>, vector<16x128xf32>
    %cst_19 = arith.constant dense<0xFF800000> : vector<16xf32>
    %26 = vector.multi_reduction <maximumf>, %25, %cst_19 [1] : vector<16x128xf32> to vector<16xf32>
    %27 = vector.shape_cast %26 : vector<16xf32> to vector<16x1xf32>
    %28 = vector.broadcast %27 : vector<16x1xf32> to vector<16x128xf32>
    %29 = arith.subf %25, %28 : vector<16x128xf32>
    %30 = math.exp %29 : vector<16x128xf32>
    %cst_20 = arith.constant dense<0.000000e+00> : vector<16xf32>
    %31 = vector.multi_reduction <add>, %30, %cst_20 [1] : vector<16x128xf32> to vector<16xf32>
    %32 = vector.shape_cast %31 : vector<16xf32> to vector<16x1xf32>
    %cst_21 = arith.constant 9.99999968E-21 : f32
    %33 = vector.broadcast %cst_21 : f32 to vector<16x1xf32>
    %34 = arith.maximumf %32, %33 : vector<16x1xf32>
    %35 = tpu.reciprocal %34 {approx = true} : vector<16x1xf32> -> vector<16x1xf32>
    %36 = vector.broadcast %35 : vector<16x1xf32> to vector<16x128xf32>
    %37 = arith.mulf %30, %36 : vector<16x128xf32>
    %38 = arith.truncf %37 : vector<16x128xf32> to vector<16x128xbf16>
    %39 = arith.truncf %12 : vector<128x128xf32> to vector<128x128xbf16>
    %cst_22 = arith.constant dense<0.000000e+00> : vector<16x128xf32>
    %40 = tpu.matmul %38, %39, %cst_22 {dimension_numbers = #tpu.dot_dimension_numbers<[1], [0], [0], [1], [0, 0, 1, 1], [], []>} : vector<16x128xbf16>, vector<128x128xbf16>, vector<16x128xf32> -> vector<16x128xf32>
    %41 = vector.extract_strided_slice %5 {offsets = [0, 0], sizes = [1, 128], strides = [1, 1]} : vector<4x128xf32> to vector<1x128xf32>
    %42 = vector.broadcast %41 : vector<1x128xf32> to vector<16x128xf32>
    %43 = arith.addf %40, %42 : vector<16x128xf32>
    %cst_23 = arith.constant 0.000000e+00 : f32
    %44 = vector.broadcast %cst_23 : f32 to vector<16x128xf32>
    %45 = arith.maximumf %43, %44 : vector<16x128xf32>
    %c0_24 = arith.constant 0 : index
    %c0_25 = arith.constant 0 : index
    %46 = vector.load %arg12[%c0_24, %c0_25] : memref<128x128xf32, #tpu.memory_space<vmem>>, vector<16x128xf32>
    tpu.vector_store %arg12[%c0_24, %c0_25], %45 {strides = array<i32>} : memref<128x128xf32, #tpu.memory_space<vmem>>, vector<16x128xf32>,
    %c0_26 = arith.constant 0 : index
    %c0_27 = arith.constant 0 : index
    %47 = vector.load %arg12[%c0_26, %c0_27] : memref<128x128xf32, #tpu.memory_space<vmem>>, vector<128x128xf32>
    %48 = arith.truncf %47 : vector<128x128xf32> to vector<128x128xbf16>
    %c1 = arith.constant 1 : index
    %c0_28 = arith.constant 0 : index
    %c0_29 = arith.constant 0 : index
    %49 = vector.load %arg3[%c1, %c0_28, %c0_29] : memref<4x128x128xbf16, #tpu.memory_space<vmem>>, vector<1x128x128xbf16>
    %50 = vector.shape_cast %49 : vector<1x128x128xbf16> to vector<128x128xbf16>
    %cst_30 = arith.constant dense<0.000000e+00> : vector<128x128xf32>
    %51 = tpu.matmul %48, %50, %cst_30 {dimension_numbers = #tpu.dot_dimension_numbers<[1], [0], [0], [1], [0, 0, 1, 1], [], []>} : vector<128x128xbf16>, vector<128x128xbf16>, vector<128x128xf32> -> vector<128x128xf32>
    %52 = vector.extract_strided_slice %51 {offsets = [0, 127], sizes = [16, 1], strides = [1, 1]} : vector<128x128xf32> to vector<16x1xf32>
    %53 = vector.extract_strided_slice %4 {offsets = [1, 0], sizes = [1, 128], strides = [1, 1]} : vector<4x128xbf16> to vector<1x128xbf16>
    %cst_31 = arith.constant dense<0.000000e+00> : vector<1x128xf32>
    %54 = tpu.matmul %53, %48, %cst_31 {dimension_numbers = #tpu.dot_dimension_numbers<[1], [1], [0], [0], [0, 0, 1, 0], [], []>} : vector<1x128xbf16>, vector<128x128xbf16>, vector<1x128xf32> -> vector<1x128xf32>
    %55 = vector.broadcast %52 : vector<16x1xf32> to vector<16x128xf32>
    %56 = vector.broadcast %54 : vector<1x128xf32> to vector<16x128xf32>
    %57 = arith.addf %55, %56 : vector<16x128xf32>
    %cst_32 = arith.constant 0.000000e+00 : f32
    %58 = vector.broadcast %cst_32 : f32 to vector<16x128xf32>
    %59 = arith.cmpf ogt, %57, %58 : vector<16x128xf32>
    %cst_33 = arith.constant 2.000000e-01 : f32
    %60 = vector.broadcast %cst_33 : f32 to vector<16x128xf32>
    %61 = arith.mulf %60, %57 : vector<16x128xf32>
    %62 = arith.select %59, %57, %61 : vector<16x128xi1>, vector<16x128xf32>
    %cst_34 = arith.constant -1.000000e+30 : f32
    %63 = vector.broadcast %cst_34 : f32 to vector<16x128xf32>
    %64 = arith.select %2, %62, %63 : vector<16x128xi1>, vector<16x128xf32>
    %cst_35 = arith.constant dense<0xFF800000> : vector<16xf32>
    %65 = vector.multi_reduction <maximumf>, %64, %cst_35 [1] : vector<16x128xf32> to vector<16xf32>
    %66 = vector.shape_cast %65 : vector<16xf32> to vector<16x1xf32>
    %67 = vector.broadcast %66 : vector<16x1xf32> to vector<16x128xf32>
    %68 = arith.subf %64, %67 : vector<16x128xf32>
    %69 = math.exp %68 : vector<16x128xf32>
    %cst_36 = arith.constant dense<0.000000e+00> : vector<16xf32>
    %70 = vector.multi_reduction <add>, %69, %cst_36 [1] : vector<16x128xf32> to vector<16xf32>
    %71 = vector.shape_cast %70 : vector<16xf32> to vector<16x1xf32>
    %cst_37 = arith.constant 9.99999968E-21 : f32
    %72 = vector.broadcast %cst_37 : f32 to vector<16x1xf32>
    %73 = arith.maximumf %71, %72 : vector<16x1xf32>
    %74 = tpu.reciprocal %73 {approx = true} : vector<16x1xf32> -> vector<16x1xf32>
    %75 = vector.broadcast %74 : vector<16x1xf32> to vector<16x128xf32>
    %76 = arith.mulf %69, %75 : vector<16x128xf32>
    %77 = arith.truncf %76 : vector<16x128xf32> to vector<16x128xbf16>
    %78 = arith.truncf %51 : vector<128x128xf32> to vector<128x128xbf16>
    %cst_38 = arith.constant dense<0.000000e+00> : vector<16x128xf32>
    %79 = tpu.matmul %77, %78, %cst_38 {dimension_numbers = #tpu.dot_dimension_numbers<[1], [0], [0], [1], [0, 0, 1, 1], [], []>} : vector<16x128xbf16>, vector<128x128xbf16>, vector<16x128xf32> -> vector<16x128xf32>
    %80 = vector.extract_strided_slice %5 {offsets = [1, 0], sizes = [1, 128], strides = [1, 1]} : vector<4x128xf32> to vector<1x128xf32>
    %81 = vector.broadcast %80 : vector<1x128xf32> to vector<16x128xf32>
    %82 = arith.addf %79, %81 : vector<16x128xf32>
    %cst_39 = arith.constant 0.000000e+00 : f32
    %83 = vector.broadcast %cst_39 : f32 to vector<16x128xf32>
    %84 = arith.maximumf %82, %83 : vector<16x128xf32>
    %c0_40 = arith.constant 0 : index
    %c0_41 = arith.constant 0 : index
    %85 = vector.load %arg12[%c0_40, %c0_41] : memref<128x128xf32, #tpu.memory_space<vmem>>, vector<16x128xf32>
    tpu.vector_store %arg12[%c0_40, %c0_41], %84 {strides = array<i32>} : memref<128x128xf32, #tpu.memory_space<vmem>>, vector<16x128xf32>,
    %c0_42 = arith.constant 0 : index
    %c0_43 = arith.constant 0 : index
    %86 = vector.load %arg12[%c0_42, %c0_43] : memref<128x128xf32, #tpu.memory_space<vmem>>, vector<128x128xf32>
    %87 = arith.truncf %86 : vector<128x128xf32> to vector<128x128xbf16>
    %c2 = arith.constant 2 : index
    %c0_44 = arith.constant 0 : index
    %c0_45 = arith.constant 0 : index
    %88 = vector.load %arg3[%c2, %c0_44, %c0_45] : memref<4x128x128xbf16, #tpu.memory_space<vmem>>, vector<1x128x128xbf16>
    %89 = vector.shape_cast %88 : vector<1x128x128xbf16> to vector<128x128xbf16>
    %cst_46 = arith.constant dense<0.000000e+00> : vector<128x128xf32>
    %90 = tpu.matmul %87, %89, %cst_46 {dimension_numbers = #tpu.dot_dimension_numbers<[1], [0], [0], [1], [0, 0, 1, 1], [], []>} : vector<128x128xbf16>, vector<128x128xbf16>, vector<128x128xf32> -> vector<128x128xf32>
    %91 = vector.extract_strided_slice %90 {offsets = [0, 127], sizes = [16, 1], strides = [1, 1]} : vector<128x128xf32> to vector<16x1xf32>
    %92 = vector.extract_strided_slice %4 {offsets = [2, 0], sizes = [1, 128], strides = [1, 1]} : vector<4x128xbf16> to vector<1x128xbf16>
    %cst_47 = arith.constant dense<0.000000e+00> : vector<1x128xf32>
    %93 = tpu.matmul %92, %87, %cst_47 {dimension_numbers = #tpu.dot_dimension_numbers<[1], [1], [0], [0], [0, 0, 1, 0], [], []>} : vector<1x128xbf16>, vector<128x128xbf16>, vector<1x128xf32> -> vector<1x128xf32>
    %94 = vector.broadcast %91 : vector<16x1xf32> to vector<16x128xf32>
    %95 = vector.broadcast %93 : vector<1x128xf32> to vector<16x128xf32>
    %96 = arith.addf %94, %95 : vector<16x128xf32>
    %cst_48 = arith.constant 0.000000e+00 : f32
    %97 = vector.broadcast %cst_48 : f32 to vector<16x128xf32>
    %98 = arith.cmpf ogt, %96, %97 : vector<16x128xf32>
    %cst_49 = arith.constant 2.000000e-01 : f32
    %99 = vector.broadcast %cst_49 : f32 to vector<16x128xf32>
    %100 = arith.mulf %99, %96 : vector<16x128xf32>
    %101 = arith.select %98, %96, %100 : vector<16x128xi1>, vector<16x128xf32>
    %cst_50 = arith.constant -1.000000e+30 : f32
    %102 = vector.broadcast %cst_50 : f32 to vector<16x128xf32>
    %103 = arith.select %2, %101, %102 : vector<16x128xi1>, vector<16x128xf32>
    %cst_51 = arith.constant dense<0xFF800000> : vector<16xf32>
    %104 = vector.multi_reduction <maximumf>, %103, %cst_51 [1] : vector<16x128xf32> to vector<16xf32>
    %105 = vector.shape_cast %104 : vector<16xf32> to vector<16x1xf32>
    %106 = vector.broadcast %105 : vector<16x1xf32> to vector<16x128xf32>
    %107 = arith.subf %103, %106 : vector<16x128xf32>
    %108 = math.exp %107 : vector<16x128xf32>
    %cst_52 = arith.constant dense<0.000000e+00> : vector<16xf32>
    %109 = vector.multi_reduction <add>, %108, %cst_52 [1] : vector<16x128xf32> to vector<16xf32>
    %110 = vector.shape_cast %109 : vector<16xf32> to vector<16x1xf32>
    %cst_53 = arith.constant 9.99999968E-21 : f32
    %111 = vector.broadcast %cst_53 : f32 to vector<16x1xf32>
    %112 = arith.maximumf %110, %111 : vector<16x1xf32>
    %113 = tpu.reciprocal %112 {approx = true} : vector<16x1xf32> -> vector<16x1xf32>
    %114 = vector.broadcast %113 : vector<16x1xf32> to vector<16x128xf32>
    %115 = arith.mulf %108, %114 : vector<16x128xf32>
    %116 = arith.truncf %115 : vector<16x128xf32> to vector<16x128xbf16>
    %117 = arith.truncf %90 : vector<128x128xf32> to vector<128x128xbf16>
    %cst_54 = arith.constant dense<0.000000e+00> : vector<16x128xf32>
    %118 = tpu.matmul %116, %117, %cst_54 {dimension_numbers = #tpu.dot_dimension_numbers<[1], [0], [0], [1], [0, 0, 1, 1], [], []>} : vector<16x128xbf16>, vector<128x128xbf16>, vector<16x128xf32> -> vector<16x128xf32>
    %119 = vector.extract_strided_slice %5 {offsets = [2, 0], sizes = [1, 128], strides = [1, 1]} : vector<4x128xf32> to vector<1x128xf32>
    %120 = vector.broadcast %119 : vector<1x128xf32> to vector<16x128xf32>
    %121 = arith.addf %118, %120 : vector<16x128xf32>
    %cst_55 = arith.constant 0.000000e+00 : f32
    %122 = vector.broadcast %cst_55 : f32 to vector<16x128xf32>
    %123 = arith.maximumf %121, %122 : vector<16x128xf32>
    %c0_56 = arith.constant 0 : index
    %c0_57 = arith.constant 0 : index
    %124 = vector.load %arg12[%c0_56, %c0_57] : memref<128x128xf32, #tpu.memory_space<vmem>>, vector<16x128xf32>
    tpu.vector_store %arg12[%c0_56, %c0_57], %123 {strides = array<i32>} : memref<128x128xf32, #tpu.memory_space<vmem>>, vector<16x128xf32>,
    %c0_58 = arith.constant 0 : index
    %c0_59 = arith.constant 0 : index
    %125 = vector.load %arg12[%c0_58, %c0_59] : memref<128x128xf32, #tpu.memory_space<vmem>>, vector<128x128xf32>
    %126 = arith.truncf %125 : vector<128x128xf32> to vector<128x128xbf16>
    %c3 = arith.constant 3 : index
    %c0_60 = arith.constant 0 : index
    %c0_61 = arith.constant 0 : index
    %127 = vector.load %arg3[%c3, %c0_60, %c0_61] : memref<4x128x128xbf16, #tpu.memory_space<vmem>>, vector<1x128x128xbf16>
    %128 = vector.shape_cast %127 : vector<1x128x128xbf16> to vector<128x128xbf16>
    %cst_62 = arith.constant dense<0.000000e+00> : vector<128x128xf32>
    %129 = tpu.matmul %126, %128, %cst_62 {dimension_numbers = #tpu.dot_dimension_numbers<[1], [0], [0], [1], [0, 0, 1, 1], [], []>} : vector<128x128xbf16>, vector<128x128xbf16>, vector<128x128xf32> -> vector<128x128xf32>
    %130 = vector.extract_strided_slice %129 {offsets = [0, 127], sizes = [16, 1], strides = [1, 1]} : vector<128x128xf32> to vector<16x1xf32>
    %131 = vector.extract_strided_slice %4 {offsets = [3, 0], sizes = [1, 128], strides = [1, 1]} : vector<4x128xbf16> to vector<1x128xbf16>
    %cst_63 = arith.constant dense<0.000000e+00> : vector<1x128xf32>
    %132 = tpu.matmul %131, %126, %cst_63 {dimension_numbers = #tpu.dot_dimension_numbers<[1], [1], [0], [0], [0, 0, 1, 0], [], []>} : vector<1x128xbf16>, vector<128x128xbf16>, vector<1x128xf32> -> vector<1x128xf32>
    %133 = vector.broadcast %130 : vector<16x1xf32> to vector<16x128xf32>
    %134 = vector.broadcast %132 : vector<1x128xf32> to vector<16x128xf32>
    %135 = arith.addf %133, %134 : vector<16x128xf32>
    %cst_64 = arith.constant 0.000000e+00 : f32
    %136 = vector.broadcast %cst_64 : f32 to vector<16x128xf32>
    %137 = arith.cmpf ogt, %135, %136 : vector<16x128xf32>
    %cst_65 = arith.constant 2.000000e-01 : f32
    %138 = vector.broadcast %cst_65 : f32 to vector<16x128xf32>
    %139 = arith.mulf %138, %135 : vector<16x128xf32>
    %140 = arith.select %137, %135, %139 : vector<16x128xi1>, vector<16x128xf32>
    %cst_66 = arith.constant -1.000000e+30 : f32
    %141 = vector.broadcast %cst_66 : f32 to vector<16x128xf32>
    %142 = arith.select %2, %140, %141 : vector<16x128xi1>, vector<16x128xf32>
    %cst_67 = arith.constant dense<0xFF800000> : vector<16xf32>
    %143 = vector.multi_reduction <maximumf>, %142, %cst_67 [1] : vector<16x128xf32> to vector<16xf32>
    %144 = vector.shape_cast %143 : vector<16xf32> to vector<16x1xf32>
    %145 = vector.broadcast %144 : vector<16x1xf32> to vector<16x128xf32>
    %146 = arith.subf %142, %145 : vector<16x128xf32>
    %147 = math.exp %146 : vector<16x128xf32>
    %cst_68 = arith.constant dense<0.000000e+00> : vector<16xf32>
    %148 = vector.multi_reduction <add>, %147, %cst_68 [1] : vector<16x128xf32> to vector<16xf32>
    %149 = vector.shape_cast %148 : vector<16xf32> to vector<16x1xf32>
    %cst_69 = arith.constant 9.99999968E-21 : f32
    %150 = vector.broadcast %cst_69 : f32 to vector<16x1xf32>
    %151 = arith.maximumf %149, %150 : vector<16x1xf32>
    %152 = tpu.reciprocal %151 {approx = true} : vector<16x1xf32> -> vector<16x1xf32>
    %153 = vector.broadcast %152 : vector<16x1xf32> to vector<16x128xf32>
    %154 = arith.mulf %147, %153 : vector<16x128xf32>
    %155 = arith.truncf %154 : vector<16x128xf32> to vector<16x128xbf16>
    %156 = arith.truncf %129 : vector<128x128xf32> to vector<128x128xbf16>
    %cst_70 = arith.constant dense<0.000000e+00> : vector<16x128xf32>
    %157 = tpu.matmul %155, %156, %cst_70 {dimension_numbers = #tpu.dot_dimension_numbers<[1], [0], [0], [1], [0, 0, 1, 1], [], []>} : vector<16x128xbf16>, vector<128x128xbf16>, vector<16x128xf32> -> vector<16x128xf32>
    %158 = vector.extract_strided_slice %5 {offsets = [3, 0], sizes = [1, 128], strides = [1, 1]} : vector<4x128xf32> to vector<1x128xf32>
    %159 = vector.broadcast %158 : vector<1x128xf32> to vector<16x128xf32>
    %160 = arith.addf %157, %159 : vector<16x128xf32>
    %cst_71 = arith.constant 0.000000e+00 : f32
    %161 = vector.broadcast %cst_71 : f32 to vector<16x128xf32>
    %162 = arith.maximumf %160, %161 : vector<16x128xf32>
    %c0_72 = arith.constant 0 : index
    %c0_73 = arith.constant 0 : index
    %163 = vector.load %arg12[%c0_72, %c0_73] : memref<128x128xf32, #tpu.memory_space<vmem>>, vector<16x128xf32>
    tpu.vector_store %arg12[%c0_72, %c0_73], %162 {strides = array<i32>} : memref<128x128xf32, #tpu.memory_space<vmem>>, vector<16x128xf32>,
    %c0_74 = arith.constant 0 : index
    %c0_75 = arith.constant 0 : index
    %164 = vector.load %arg12[%c0_74, %c0_75] : memref<128x128xf32, #tpu.memory_space<vmem>>, vector<128x128xf32>
    %165 = arith.truncf %164 : vector<128x128xf32> to vector<128x128xbf16>
    %c0_76 = arith.constant 0 : index
    %c0_77 = arith.constant 0 : index
    %166 = vector.load %arg6[%c0_76, %c0_77] : memref<8x128xf32, #tpu.memory_space<vmem>>, vector<8x128xf32>
    %167 = arith.truncf %166 : vector<8x128xf32> to vector<8x128xbf16>
    %cst_78 = arith.constant dense<0.000000e+00> : vector<8x128xf32>
    %168 = tpu.matmul %167, %165, %cst_78 {dimension_numbers = #tpu.dot_dimension_numbers<[1], [0], [0], [1], [0, 0, 1, 1], [], []>} : vector<8x128xbf16>, vector<128x128xbf16>, vector<8x128xf32> -> vector<8x128xf32>
    %169 = arith.truncf %168 : vector<8x128xf32> to vector<8x128xbf16>
    %c0_79 = arith.constant 0 : index
    %c0_80 = arith.constant 0 : index
    %170 = vector.load %arg7[%c0_79, %c0_80] : memref<128x128xbf16, #tpu.memory_space<vmem>>, vector<128x128xbf16>
    %cst_81 = arith.constant dense<0.000000e+00> : vector<8x128xf32>
    %171 = tpu.matmul %169, %170, %cst_81 {dimension_numbers = #tpu.dot_dimension_numbers<[1], [0], [0], [1], [0, 0, 1, 1], [], []>} : vector<8x128xbf16>, vector<128x128xbf16>, vector<8x128xf32> -> vector<8x128xf32>
    %c0_82 = arith.constant 0 : index
    %c0_83 = arith.constant 0 : index
    %172 = vector.load %arg8[%c0_82, %c0_83] : memref<1x128xf32, #tpu.memory_space<vmem>>, vector<1x128xf32>
    %173 = vector.broadcast %172 : vector<1x128xf32> to vector<8x128xf32>
    %174 = arith.addf %171, %173 : vector<8x128xf32>
    %cst_84 = arith.constant 0.000000e+00 : f32
    %175 = vector.broadcast %cst_84 : f32 to vector<8x128xf32>
    %176 = arith.maximumf %174, %175 : vector<8x128xf32>
    %177 = arith.truncf %176 : vector<8x128xf32> to vector<8x128xbf16>
    %c0_85 = arith.constant 0 : index
    %c0_86 = arith.constant 0 : index
    %178 = vector.load %arg9[%c0_85, %c0_86] : memref<128x128xbf16, #tpu.memory_space<vmem>>, vector<128x128xbf16>
    %cst_87 = arith.constant dense<0.000000e+00> : vector<8x128xf32>
    %179 = tpu.matmul %177, %178, %cst_87 {dimension_numbers = #tpu.dot_dimension_numbers<[1], [0], [0], [1], [0, 0, 1, 1], [], []>} : vector<8x128xbf16>, vector<128x128xbf16>, vector<8x128xf32> -> vector<8x128xf32>
    %c0_88 = arith.constant 0 : index
    %c0_89 = arith.constant 0 : index
    %180 = vector.load %arg10[%c0_88, %c0_89] : memref<1x128xf32, #tpu.memory_space<vmem>>, vector<1x128xf32>
    %181 = vector.broadcast %180 : vector<1x128xf32> to vector<8x128xf32>
    %182 = arith.addf %179, %181 : vector<8x128xf32>
    %c0_90 = arith.constant 0 : index
    %c0_91 = arith.constant 0 : index
    %183 = vector.load %arg11[%c0_90, %c0_91] : memref<8x128xf32, #tpu.memory_space<vmem>>, vector<8x128xf32>
    tpu.vector_store %arg11[%c0_90, %c0_91], %182 {strides = array<i32>} : memref<8x128xf32, #tpu.memory_space<vmem>>, vector<8x128xf32>,
    return
  }
  func.func @transform_0(%arg0: i32) -> (i32, i32) {
    %c0_i32 = arith.constant 0 : i32
    %c0_i32_0 = arith.constant 0 : i32
    %c0_i32_1 = arith.constant 0 : i32
    return %c0_i32, %c0_i32_0 : i32, i32
  }
  func.func @transform_1(%arg0: i32) -> (i32, i32) {
    %c0_i32 = arith.constant 0 : i32
    %c0_i32_0 = arith.constant 0 : i32
    %c0_i32_1 = arith.constant 0 : i32
    return %c0_i32, %c0_i32_0 : i32, i32
  }
  func.func @transform_2(%arg0: i32) -> (i32, i32, i32) {
    %c0_i32 = arith.constant 0 : i32
    %c0_i32_0 = arith.constant 0 : i32
    %c0_i32_1 = arith.constant 0 : i32
    %c0_i32_2 = arith.constant 0 : i32
    return %c0_i32, %c0_i32_0, %c0_i32_1 : i32, i32, i32
  }
  func.func @transform_3(%arg0: i32) -> (i32, i32) {
    %c0_i32 = arith.constant 0 : i32
    %c0_i32_0 = arith.constant 0 : i32
    %c0_i32_1 = arith.constant 0 : i32
    return %c0_i32, %c0_i32_0 : i32, i32
  }
  func.func @transform_4(%arg0: i32) -> (i32, i32) {
    %c0_i32 = arith.constant 0 : i32
    %c0_i32_0 = arith.constant 0 : i32
    %c0_i32_1 = arith.constant 0 : i32
    return %c0_i32, %c0_i32_0 : i32, i32
  }
  func.func @transform_5(%arg0: i32) -> (i32, i32) {
    %c0_i32 = arith.constant 0 : i32
    %c0_i32_0 = arith.constant 0 : i32
    %c0_i32_1 = arith.constant 0 : i32
    return %c0_i32, %c0_i32_0 : i32, i32
  }
  func.func @transform_6(%arg0: i32) -> (i32, i32) {
    %c0_i32 = arith.constant 0 : i32
    %c0_i32_0 = arith.constant 0 : i32
    %c0_i32_1 = arith.constant 0 : i32
    return %c0_i32, %c0_i32_0 : i32, i32
  }
  func.func @transform_7(%arg0: i32) -> (i32, i32) {
    %c0_i32 = arith.constant 0 : i32
    %c0_i32_0 = arith.constant 0 : i32
    %c0_i32_1 = arith.constant 0 : i32
    return %c0_i32, %c0_i32_0 : i32, i32
  }
  func.func @transform_8(%arg0: i32) -> (i32, i32) {
    %c0_i32 = arith.constant 0 : i32
    %c0_i32_0 = arith.constant 0 : i32
    %c0_i32_1 = arith.constant 0 : i32
    return %c0_i32, %c0_i32_0 : i32, i32
  }
  func.func @transform_9(%arg0: i32) -> (i32, i32) {
    %c0_i32 = arith.constant 0 : i32
    %c0_i32_0 = arith.constant 0 : i32
    %c0_i32_1 = arith.constant 0 : i32
    return %c0_i32, %c0_i32_0 : i32, i32
  }
  func.func @transform_10(%arg0: i32) -> (i32, i32) {
    %c0_i32 = arith.constant 0 : i32
    %c0_i32_0 = arith.constant 0 : i32
    %c0_i32_1 = arith.constant 0 : i32
    return %c0_i32, %c0_i32_0 : i32, i32
  }
}

</mosaic_0001>

<llo_original>
// kernel: gat_forward.1
$region0: #{gat_forward.1}
  #allocation0 [shape = 'u32[]', space=smem, size = 0x4, offset = 0x4, fixed_abs, tag = 'smem constant byte address 0x4 - core index']
  #allocation1 [shape = 'u32[144,128]{1,0:T(1,128)}', space=vmem, size = 0x12000, scoped, tag = 'internal scratch']
  #allocation2 [shape = 'f32[128,128]{1,0:T(8,128)}', space=vmem, size = 0x10000, scoped, tag = 'scratch operand']
  %s0 = inlined_call_operand.vmem [shape: f32[128,128], index: 0, kind: input, shape index: {}]
  %s1 = inlined_call_operand.vmem [shape: f32[16,128], index: 1, kind: input, shape index: {}]
  %s2 = inlined_call_operand.hbm [shape: bf16[4,128,128], index: 2, kind: input, shape index: {}]
  %s3 = inlined_call_operand.vmem [shape: f32[4,128], index: 3, kind: input, shape index: {}]
  %s4 = inlined_call_operand.vmem [shape: f32[4,128], index: 4, kind: input, shape index: {}]
  %s5 = inlined_call_operand.vmem [shape: f32[8,128], index: 5, kind: input, shape index: {}]
  %s6 = inlined_call_operand.vmem [shape: bf16[128,128], index: 6, kind: input, shape index: {}]
  %s7 = inlined_call_operand.vmem [shape: f32[1,128], index: 7, kind: input, shape index: {}]
  %s8 = inlined_call_operand.vmem [shape: bf16[128,128], index: 8, kind: input, shape index: {}]
  %s9 = inlined_call_operand.vmem [shape: f32[1,128], index: 9, kind: input, shape index: {}]
  %s10 = inlined_call_operand.vmem [shape: f32[8,128], index: 10, kind: output, shape index: {}]
  %s11 = sld [smem:[#allocation0]]
  $region54: #{gat_forward.1} parent=0
    _
  %s13 = ssub.s32 1, %s11
  %s14 = scalar_select 0, %s13, %s11
  $region1: #{gat_forward.1} parent=0
    #allocation3 [shape = 'u8[131072]{0}', space=vmem, size = 0x20000, scoped, tag = 'input window, operand 2, single buffered']
    #allocation4 [shape = 's32[1]{0}', space=sflag, size = 0x4, scoped, tag = 'scoped memory for gat_forward.1']
    %15 = vsyncpa [#allocation4], 0
    // Predicated region
    $region2: #{gat_forward.1} parent=1 // pred_check
      _
    $region3: #{gat_forward.1} parent=1 // pred_check_branch
      %17 = sbr.rel (0) target = $region5
    $region4: #{gat_forward.1} parent=1 // pred_region
      _
    $region5: #{gat_forward.1} parent=1 // pred_fallthru
      _
    // Predicated region
    $region6: #{gat_forward.1} parent=1 // pred_check
      _
    $region7: #{gat_forward.1} parent=1 // pred_check_branch
      %19 = sbr.rel (0) target = $region9
    $region8: #{gat_forward.1} parent=1 // pred_region
      _
    $region9: #{gat_forward.1} parent=1 // pred_fallthru
      _
    // Predicated region
    $region10: #{gat_forward.1} parent=1 // pred_check
      _
    $region11: #{gat_forward.1} parent=1 // pred_check_branch
      %21 = sbr.rel (0) target = $region13
    $region12: #{gat_forward.1} parent=1 // pred_region
      %s23 = ssub.s32 4096, 4096
      %24 = vsyncadd [#allocation4], %s23
      %s25 = sshll.u32 [#allocation3], 4
      %s26 = int_to_ptr.vmem [resolvable:$true] %s25
      %31 = dma.hbm_to_vmem [thread:$0]  %s2, 4096, %s26, [#allocation4], 64, 64, 4
    $region13: #{gat_forward.1} parent=1 // pred_fallthru
      _
    // Predicated region
    $region14: #{gat_forward.1} parent=1 // pred_check
      _
    $region15: #{gat_forward.1} parent=1 // pred_check_branch
      %33 = sbr.rel (0) target = $region17
    $region16: #{gat_forward.1} parent=1 // pred_region
      _
    $region17: #{gat_forward.1} parent=1 // pred_fallthru
      _
    // Predicated region
    $region18: #{gat_forward.1} parent=1 // pred_check
      _
    $region19: #{gat_forward.1} parent=1 // pred_check_branch
      %35 = sbr.rel (0) target = $region21
    $region20: #{gat_forward.1} parent=1 // pred_region
      _
    $region21: #{gat_forward.1} parent=1 // pred_fallthru
      _
    // Predicated region
    $region22: #{gat_forward.1} parent=1 // pred_check
      _
    $region23: #{gat_forward.1} parent=1 // pred_check_branch
      %37 = sbr.rel (0) target = $region25
    $region24: #{gat_forward.1} parent=1 // pred_region
      _
    $region25: #{gat_forward.1} parent=1 // pred_fallthru
      _
    // Predicated region
    $region26: #{gat_forward.1} parent=1 // pred_check
      _
    $region27: #{gat_forward.1} parent=1 // pred_check_branch
      %39 = sbr.rel (0) target = $region29
    $region28: #{gat_forward.1} parent=1 // pred_region
      _
    $region29: #{gat_forward.1} parent=1 // pred_fallthru
      _
    // Predicated region
    $region30: #{gat_forward.1} parent=1 // pred_check
      _
    $region31: #{gat_forward.1} parent=1 // pred_check_branch
      %41 = sbr.rel (0) target = $region33
    $region32: #{gat_forward.1} parent=1 // pred_region
      _
    $region33: #{gat_forward.1} parent=1 // pred_fallthru
      _
    // Predicated region
    $region34: #{gat_forward.1} parent=1 // pred_check
      _
    $region35: #{gat_forward.1} parent=1 // pred_check_branch
      %43 = sbr.rel (0) target = $region37
    $region36: #{gat_forward.1} parent=1 // pred_region
      _
    $region37: #{gat_forward.1} parent=1 // pred_fallthru
      _
    // Predicated region
    $region38: #{gat_forward.1} parent=1 // pred_check
      _
    $region39: #{gat_forward.1} parent=1 // pred_check_branch
      %45 = sbr.rel (0) target = $region41
    $region40: #{gat_forward.1} parent=1 // pred_region
      _
    $region41: #{gat_forward.1} parent=1 // pred_fallthru
      _
    // Predicated region
    $region42: #{gat_forward.1} parent=1 // pred_check
      _
    $region43: #{gat_forward.1} parent=1 // pred_check_branch
      %47 = sbr.rel (0) target = $region45
    $region44: #{gat_forward.1} parent=1 // pred_region
      %48 = dma.done [#allocation4], 4096
    $region45: #{gat_forward.1} parent=1 // pred_fallthru
      _
    %v50 = vld [vmem:[%s1] sm:$0xff]
    %v51 = vld [vmem:[%s1 + $0x8] sm:$0xff]
    %vm52 = vcmp.gt.f32.partialorder %v50, 0.0
    %vm53 = vcmp.gt.f32.partialorder %v51, 0.0
    %v54 = vld [vmem:[%s3] sm:$0xf]
    %v55 = vpack.c.bf16 %v54, %v54
    %v56 = vld [vmem:[%s4] sm:$0xf]
    %v57 = vld [vmem:[%s0] sm:$0xff]
    %v58 = vld [vmem:[%s0 + $0x8] sm:$0xff]
    %v59 = vld [vmem:[%s0 + $0x10] sm:$0xff]
    %v60 = vld [vmem:[%s0 + $0x18] sm:$0xff]
    %v61 = vld [vmem:[%s0 + $0x20] sm:$0xff]
    %v62 = vld [vmem:[%s0 + $0x28] sm:$0xff]
    %v63 = vld [vmem:[%s0 + $0x30] sm:$0xff]
    %v64 = vld [vmem:[%s0 + $0x38] sm:$0xff]
    %v65 = vld [vmem:[%s0 + $0x40] sm:$0xff]
    %v66 = vld [vmem:[%s0 + $0x48] sm:$0xff]
    %v67 = vld [vmem:[%s0 + $0x50] sm:$0xff]
    %v68 = vld [vmem:[%s0 + $0x58] sm:$0xff]
    %v69 = vld [vmem:[%s0 + $0x60] sm:$0xff]
    %v70 = vld [vmem:[%s0 + $0x68] sm:$0xff]
    %v71 = vld [vmem:[%s0 + $0x70] sm:$0xff]
    %v72 = vld [vmem:[%s0 + $0x78] sm:$0xff]
    %73 = vst [vmem:[#allocation2] sm:$0xff] %v57
    %74 = vst [vmem:[#allocation2 + $0x8] sm:$0xff] %v58
    %75 = vst [vmem:[#allocation2 + $0x10] sm:$0xff] %v59
    %76 = vst [vmem:[#allocation2 + $0x18] sm:$0xff] %v60
    %77 = vst [vmem:[#allocation2 + $0x20] sm:$0xff] %v61
    %78 = vst [vmem:[#allocation2 + $0x28] sm:$0xff] %v62
    %79 = vst [vmem:[#allocation2 + $0x30] sm:$0xff] %v63
    %80 = vst [vmem:[#allocation2 + $0x38] sm:$0xff] %v64
    %81 = vst [vmem:[#allocation2 + $0x40] sm:$0xff] %v65
    %82 = vst [vmem:[#allocation2 + $0x48] sm:$0xff] %v66
    %83 = vst [vmem:[#allocation2 + $0x50] sm:$0xff] %v67
    %84 = vst [vmem:[#allocation2 + $0x58] sm:$0xff] %v68
    %85 = vst [vmem:[#allocation2 + $0x60] sm:$0xff] %v69
    %86 = vst [vmem:[#allocation2 + $0x68] sm:$0xff] %v70
    %87 = vst [vmem:[#allocation2 + $0x70] sm:$0xff] %v71
    %88 = vst [vmem:[#allocation2 + $0x78] sm:$0xff] %v72
    %v89 = vld [vmem:[#allocation2] sm:$0xff]
    %v90 = vld [vmem:[#allocation2 + $0x8] sm:$0xff]
    %v91 = vld [vmem:[#allocation2 + $0x10] sm:$0xff]
    %v92 = vld [vmem:[#allocation2 + $0x18] sm:$0xff]
    %v93 = vld [vmem:[#allocation2 + $0x20] sm:$0xff]
    %v94 = vld [vmem:[#allocation2 + $0x28] sm:$0xff]
    %v95 = vld [vmem:[#allocation2 + $0x30] sm:$0xff]
    %v96 = vld [vmem:[#allocation2 + $0x38] sm:$0xff]
    %v97 = vld [vmem:[#allocation2 + $0x40] sm:$0xff]
    %v98 = vld [vmem:[#allocation2 + $0x48] sm:$0xff]
    %v99 = vld [vmem:[#allocation2 + $0x50] sm:$0xff]
    %v100 = vld [vmem:[#allocation2 + $0x58] sm:$0xff]
    %v101 = vld [vmem:[#allocation2 + $0x60] sm:$0xff]
    %v102 = vld [vmem:[#allocation2 + $0x68] sm:$0xff]
    %v103 = vld [vmem:[#allocation2 + $0x70] sm:$0xff]
    %v104 = vld [vmem:[#allocation2 + $0x78] sm:$0xff]
    %v105 = vpack.c.bf16 %v90, %v89
    %v106 = vpack.c.bf16 %v92, %v91
    %v107 = vpack.c.bf16 %v94, %v93
    %v108 = vpack.c.bf16 %v96, %v95
    %v109 = vpack.c.bf16 %v98, %v97
    %v110 = vpack.c.bf16 %v100, %v99
    %v111 = vpack.c.bf16 %v102, %v101
    %v112 = vpack.c.bf16 %v104, %v103
    %v113 = vld [vmem:[#allocation3] sm:$0xf]
    %v114 = vld [vmem:[#allocation3 + $0x4] sm:$0xf]
    %v115 = vld [vmem:[#allocation3 + $0x8] sm:$0xf]
    %v116 = vld [vmem:[#allocation3 + $0xc] sm:$0xf]
    %v117 = vld [vmem:[#allocation3 + $0x10] sm:$0xf]
    %v118 = vld [vmem:[#allocation3 + $0x14] sm:$0xf]
    %v119 = vld [vmem:[#allocation3 + $0x18] sm:$0xf]
    %v120 = vld [vmem:[#allocation3 + $0x1c] sm:$0xf]
    %v121 = vld [vmem:[#allocation3 + $0x20] sm:$0xf]
    %v122 = vld [vmem:[#allocation3 + $0x24] sm:$0xf]
    %v123 = vld [vmem:[#allocation3 + $0x28] sm:$0xf]
    %v124 = vld [vmem:[#allocation3 + $0x2c] sm:$0xf]
    %v125 = vld [vmem:[#allocation3 + $0x30] sm:$0xf]
    %v126 = vld [vmem:[#allocation3 + $0x34] sm:$0xf]
    %v127 = vld [vmem:[#allocation3 + $0x38] sm:$0xf]
    %v128 = vld [vmem:[#allocation3 + $0x3c] sm:$0xf]
    %v145 = vunpack.c.l.b16 %v113
    %v146 = vunpack.c.l.b16 %v114
    %v147 = vunpack.c.l.b16 %v115
    %v148 = vunpack.c.l.b16 %v116
    %v149 = vunpack.c.l.b16 %v117
    %v150 = vunpack.c.l.b16 %v118
    %v151 = vunpack.c.l.b16 %v119
    %v152 = vunpack.c.l.b16 %v120
    %v153 = vunpack.c.l.b16 %v121
    %v154 = vunpack.c.l.b16 %v122
    %v155 = vunpack.c.l.b16 %v123
    %v156 = vunpack.c.l.b16 %v124
    %v157 = vunpack.c.l.b16 %v125
    %v158 = vunpack.c.l.b16 %v126
    %v159 = vunpack.c.l.b16 %v127
    %v160 = vunpack.c.l.b16 %v128
    %v161 = vpack.c.b16 %v146, %v145
    %v162 = vpack.c.b16 %v148, %v147
    %v163 = vpack.c.b16 %v150, %v149
    %v164 = vpack.c.b16 %v152, %v151
    %v165 = vpack.c.b16 %v154, %v153
    %v166 = vpack.c.b16 %v156, %v155
    %v167 = vpack.c.b16 %v158, %v157
    %v168 = vpack.c.b16 %v160, %v159
    %177 = vmatprep.subr.bf16.mxu0 0
    %178 = vmatpush1.bf16.msra.mxu0 %v161
    %179 = vmatprep.subr.bf16.mxu0 0
    %180 = vmatpush1.bf16.msra.mxu0 %v162
    %181 = vmatprep.subr.bf16.mxu0 0
    %182 = vmatpush1.bf16.msra.mxu0 %v163
    %183 = vmatprep.subr.bf16.mxu0 0
    %184 = vmatpush1.bf16.msra.mxu0 %v164
    %185 = vmatprep.subr.bf16.mxu0 0
    %186 = vmatpush1.bf16.msra.mxu0 %v165
    %187 = vmatprep.subr.bf16.mxu0 0
    %188 = vmatpush1.bf16.msra.mxu0 %v166
    %189 = vmatprep.subr.bf16.mxu0 0
    %190 = vmatpush1.bf16.msra.mxu0 %v167
    %191 = vmatprep.subr.bf16.mxu0 0
    %192 = vmatpush1.bf16.msra.mxu0 %v168
    %193 = vmatprep.subr.bf16.mxu0 0
    %194 = vmatpush1.bf16.msra.mxu0 0
    %195 = vmatprep.subr.bf16.mxu0 0
    %196 = vmatpush1.bf16.msra.mxu0 0
    %197 = vmatprep.subr.bf16.mxu0 0
    %198 = vmatpush1.bf16.msra.mxu0 0
    %199 = vmatprep.subr.bf16.mxu0 0
    %200 = vmatpush1.bf16.msra.mxu0 0
    %201 = vmatprep.subr.bf16.mxu0 0
    %202 = vmatpush1.bf16.msra.mxu0 0
    %203 = vmatprep.subr.bf16.mxu0 0
    %204 = vmatpush1.bf16.msra.mxu0 0
    %205 = vmatprep.subr.bf16.mxu0 0
    %206 = vmatpush1.bf16.msra.mxu0 0
    %207 = vmatprep.subr.bf16.mxu0 0
    %208 = vmatpush1.bf16.msra.mxu0 0
    %209 = vmatprep.mubr.bf16.mxu0 0
    %210 = vmatmul.mubr.bf16.gmra.mrb[0].mxu0 %v105
    %v211 = vpop.f32.mrb[0].mxu0
    %v212 = vadd.f32 0.0, %v211
    %v213 = vpop.f32.mrb[0].mxu0
    %v214 = vpop.f32.mrb[0].mxu0
    %v215 = vadd.f32 0.0, %v214
    %v216 = vpop.f32.mrb[0].mxu0
    %217 = vmatprep.mubr.bf16.mxu0 0
    %218 = vmatmul.mubr.bf16.gmra.mrb[0].mxu0 %v106
    %v219 = vpop.f32.mrb[0].mxu0
    %v220 = vadd.f32 0.0, %v219
    %v221 = vpop.f32.mrb[0].mxu0
    %v222 = vpop.f32.mrb[0].mxu0
    %v223 = vadd.f32 0.0, %v222
    %v224 = vpop.f32.mrb[0].mxu0
    %225 = vmatprep.mubr.bf16.mxu0 0
    %226 = vmatmul.mubr.bf16.gmra.mrb[0].mxu0 %v107
    %v227 = vpop.f32.mrb[0].mxu0
    %v228 = vadd.f32 0.0, %v227
    %v229 = vpop.f32.mrb[0].mxu0
    %v230 = vpop.f32.mrb[0].mxu0
    %v231 = vadd.f32 0.0, %v230
    %v232 = vpop.f32.mrb[0].mxu0
    %233 = vmatprep.mubr.bf16.mxu0 0
    %234 = vmatmul.mubr.bf16.gmra.mrb[0].mxu0 %v108
    %v235 = vpop.f32.mrb[0].mxu0
    %v236 = vadd.f32 0.0, %v235
    %v237 = vpop.f32.mrb[0].mxu0
    %v238 = vpop.f32.mrb[0].mxu0
    %v239 = vadd.f32 0.0, %v238
    %v240 = vpop.f32.mrb[0].mxu0
    %241 = vmatprep.mubr.bf16.mxu0 0
    %242 = vmatmul.mubr.bf16.gmra.mrb[0].mxu0 %v109
    %v243 = vpop.f32.mrb[0].mxu0
    %v244 = vadd.f32 0.0, %v243
    %v245 = vpop.f32.mrb[0].mxu0
    %v246 = vpop.f32.mrb[0].mxu0
    %v247 = vadd.f32 0.0, %v246
    %v248 = vpop.f32.mrb[0].mxu0
    %249 = vmatprep.mubr.bf16.mxu0 0
    %250 = vmatmul.mubr.bf16.gmra.mrb[0].mxu0 %v110
    %v251 = vpop.f32.mrb[0].mxu0
    %v252 = vadd.f32 0.0, %v251
    %v253 = vpop.f32.mrb[0].mxu0
    %v254 = vpop.f32.mrb[0].mxu0
    %v255 = vadd.f32 0.0, %v254
    %v256 = vpop.f32.mrb[0].mxu0
    %257 = vmatprep.mubr.bf16.mxu0 0
    %258 = vmatmul.mubr.bf16.gmra.mrb[0].mxu0 %v111
    %v259 = vpop.f32.mrb[0].mxu0
    %v260 = vadd.f32 0.0, %v259
    %v261 = vpop.f32.mrb[0].mxu0
    %v262 = vpop.f32.mrb[0].mxu0
    %v263 = vadd.f32 0.0, %v262
    %v264 = vpop.f32.mrb[0].mxu0
    %265 = vmatprep.mubr.bf16.mxu0 0
    %266 = vmatmul.mubr.bf16.gmra.mrb[0].mxu0 %v112
    %v267 = vpop.f32.mrb[0].mxu0
    %v268 = vadd.f32 0.0, %v267
    %v269 = vpop.f32.mrb[0].mxu0
    %v270 = vpop.f32.mrb[0].mxu0
    %v271 = vadd.f32 0.0, %v270
    %v272 = vpop.f32.mrb[0].mxu0
    %273 = vdwg.mxu0
    %274 = vmatprep.subr.bf16.mxu0 0
    %275 = vmatpush1.bf16.xpose.msra.mxu0 %v105
    %276 = vmatprep.subr.bf16.mxu0 0
    %277 = vmatpush1.bf16.xpose.msra.mxu0 %v106
    %278 = vmatprep.subr.bf16.mxu0 0
    %279 = vmatpush1.bf16.xpose.msra.mxu0 %v107
    %280 = vmatprep.subr.bf16.mxu0 0
    %281 = vmatpush1.bf16.xpose.msra.mxu0 %v108
    %282 = vmatprep.subr.bf16.mxu0 0
    %283 = vmatpush1.bf16.xpose.msra.mxu0 %v109
    %284 = vmatprep.subr.bf16.mxu0 0
    %285 = vmatpush1.bf16.xpose.msra.mxu0 %v110
    %286 = vmatprep.subr.bf16.mxu0 0
    %287 = vmatpush1.bf16.xpose.msra.mxu0 %v111
    %288 = vmatprep.subr.bf16.mxu0 0
    %289 = vmatpush1.bf16.xpose.msra.mxu0 %v112
    %290 = vmatprep.subr.bf16.mxu0 0
    %291 = vmatpush1.bf16.xpose.msra.mxu0 0
    %292 = vmatprep.subr.bf16.mxu0 0
    %293 = vmatpush1.bf16.xpose.msra.mxu0 0
    %294 = vmatprep.subr.bf16.mxu0 0
    %295 = vmatpush1.bf16.xpose.msra.mxu0 0
    %296 = vmatprep.subr.bf16.mxu0 0
    %297 = vmatpush1.bf16.xpose.msra.mxu0 0
    %298 = vmatprep.subr.bf16.mxu0 0
    %299 = vmatpush1.bf16.xpose.msra.mxu0 0
    %300 = vmatprep.subr.bf16.mxu0 0
    %301 = vmatpush1.bf16.xpose.msra.mxu0 0
    %302 = vmatprep.subr.bf16.mxu0 0
    %303 = vmatpush1.bf16.xpose.msra.mxu0 0
    %304 = vmatprep.subr.bf16.mxu0 0
    %305 = vmatpush1.bf16.xpose.msra.mxu0 0
    %306 = vmatprep.mubr.bf16.mxu0 0
    %307 = vmatmul.mubr.bf16.gmra.mrb[0].mxu0 %v55
    %v308 = vpop.f32.mrb[0].mxu0
    %v309 = vadd.f32 0.0, %v308
    %v310 = vpop.f32.mrb[0].mxu0
    %v311 = vpop.f32.mrb[0].mxu0
    %v312 = vpop.f32.mrb[0].mxu0
    %313 = vdwg.mxu0
    %315 = vset.pattern.permute.xlu0 127
    %316 = vperm.xlu0 %315, %v212
    %v317 = vpop.permute.xlu0 %316
    %320 = vset.pattern.permute.xlu0 127
    %321 = vperm.xlu0 %320, %v215
    %v322 = vpop.permute.xlu0 %321
    %v324 = vlaneseq
    %v325 = vshrl.u32 %v324, 7
    %v326 = vsub.s32 0, %v325
    %v327 = vrot.slane %v309, %v326
    %v328 = vadd.f32 %v317, %v327
    %v329 = vadd.f32 %v322, %v327
    %vm330 = vcmp.gt.f32.partialorder %v328, 0.0
    %vm331 = vcmp.gt.f32.partialorder %v329, 0.0
    %v332 = vmul.f32 %v328, 0.2
    %v333 = vmul.f32 %v329, 0.2
    %v334 = vsel %vm330, %v328, %v332
    %v335 = vsel %vm331, %v329, %v333
    %v336 = vsel %vm52, %v334, -1e+30
    %v337 = vsel %vm53, %v335, -1e+30
    %338 = vmax.xlane.f32.xlu0 %v336
    %v339 = vpop.xlane.xlu0 %338
    %340 = vmax.xlane.f32.xlu0 %v337
    %v341 = vpop.xlane.xlu0 %340
    %v342 = vsub.f32 %v336, %v339
    %v343 = vsub.f32 %v337, %v341
    %v344 = vmul.f32 %v342, 1.442695
    %v345 = vpow.pop %v344
    %v346 = vmul.f32 %v343, 1.442695
    %v347 = vpow.pop %v346
    %348 = vadd.xlane.f32.xlu0 %v345
    %v349 = vpop.xlane.xlu0 %348
    %350 = vadd.xlane.f32.xlu0 %v347
    %v351 = vpop.xlane.xlu0 %350
    %v352 = vmax.f32 %v349, 1e-20
    %v353 = vmax.f32 %v351, 1e-20
    %v354 = vrcp.pop %v352
    %v355 = vrcp.pop %v353
    %v356 = vmul.f32 %v345, %v354
    %v357 = vmul.f32 %v347, %v355
    %v358 = vpack.c.bf16 %v357, %v356
    %v359 = vpack.c.bf16 %v215, %v212
    %v360 = vpack.c.bf16 %v223, %v220
    %v361 = vpack.c.bf16 %v231, %v228
    %v362 = vpack.c.bf16 %v239, %v236
    %v363 = vpack.c.bf16 %v247, %v244
    %v364 = vpack.c.bf16 %v255, %v252
    %v365 = vpack.c.bf16 %v263, %v260
    %v366 = vpack.c.bf16 %v271, %v268
    %v367 = vlaneseq
    %v368 = vshrl.u32 %v367, 7
    %v369 = vsub.s32 0, %v368
    %v370 = vrot.slane %v56, %v369
    %371 = vmatprep.subr.bf16.mxu0 0
    %372 = vmatpush1.bf16.msra.mxu0 %v359
    %373 = vmatprep.subr.bf16.mxu0 0
    %374 = vmatpush1.bf16.msra.mxu0 %v360
    %375 = vmatprep.subr.bf16.mxu0 0
    %376 = vmatpush1.bf16.msra.mxu0 %v361
    %377 = vmatprep.subr.bf16.mxu0 0
    %378 = vmatpush1.bf16.msra.mxu0 %v362
    %379 = vmatprep.subr.bf16.mxu0 0
    %380 = vmatpush1.bf16.msra.mxu0 %v363
    %381 = vmatprep.subr.bf16.mxu0 0
    %382 = vmatpush1.bf16.msra.mxu0 %v364
    %383 = vmatprep.subr.bf16.mxu0 0
    %384 = vmatpush1.bf16.msra.mxu0 %v365
    %385 = vmatprep.subr.bf16.mxu0 0
    %386 = vmatpush1.bf16.msra.mxu0 %v366
    %387 = vmatprep.subr.bf16.mxu0 0
    %388 = vmatpush1.bf16.msra.mxu0 0
    %389 = vmatprep.subr.bf16.mxu0 0
    %390 = vmatpush1.bf16.msra.mxu0 0
    %391 = vmatprep.subr.bf16.mxu0 0
    %392 = vmatpush1.bf16.msra.mxu0 0
    %393 = vmatprep.subr.bf16.mxu0 0
    %394 = vmatpush1.bf16.msra.mxu0 0
    %395 = vmatprep.subr.bf16.mxu0 0
    %396 = vmatpush1.bf16.msra.mxu0 0
    %397 = vmatprep.subr.bf16.mxu0 0
    %398 = vmatpush1.bf16.msra.mxu0 0
    %399 = vmatprep.subr.bf16.mxu0 0
    %400 = vmatpush1.bf16.msra.mxu0 0
    %401 = vmatprep.subr.bf16.mxu0 0
    %402 = vmatpush1.bf16.msra.mxu0 0
    %403 = vmatprep.mubr.bf16.mxu0 0
    %404 = vmatmul.mubr.bf16.gmra.mrb[0].mxu0 %v358
    %v405 = vpop.f32.mrb[0].mxu0
    %v406 = vadd.f32 %v370, %v405
    %v407 = vpop.f32.mrb[0].mxu0
    %v408 = vpop.f32.mrb[0].mxu0
    %v409 = vadd.f32 %v370, %v408
    %v410 = vpop.f32.mrb[0].mxu0
    %411 = vdwg.mxu0
    %v412 = vmax.f32 %v406, 0.0
    %v413 = vmax.f32 %v409, 0.0
    %414 = vst [vmem:[#allocation2] sm:$0xff] %v412
    %415 = vst [vmem:[#allocation2 + $0x8] sm:$0xff] %v413
    %v416 = vld [vmem:[#allocation2] sm:$0xff]
    %v417 = vld [vmem:[#allocation2 + $0x8] sm:$0xff]
    %v418 = vld [vmem:[#allocation2 + $0x10] sm:$0xff]
    %v419 = vld [vmem:[#allocation2 + $0x18] sm:$0xff]
    %v420 = vld [vmem:[#allocation2 + $0x20] sm:$0xff]
    %v421 = vld [vmem:[#allocation2 + $0x28] sm:$0xff]
    %v422 = vld [vmem:[#allocation2 + $0x30] sm:$0xff]
    %v423 = vld [vmem:[#allocation2 + $0x38] sm:$0xff]
    %v424 = vld [vmem:[#allocation2 + $0x40] sm:$0xff]
    %v425 = vld [vmem:[#allocation2 + $0x48] sm:$0xff]
    %v426 = vld [vmem:[#allocation2 + $0x50] sm:$0xff]
    %v427 = vld [vmem:[#allocation2 + $0x58] sm:$0xff]
    %v428 = vld [vmem:[#allocation2 + $0x60] sm:$0xff]
    %v429 = vld [vmem:[#allocation2 + $0x68] sm:$0xff]
    %v430 = vld [vmem:[#allocation2 + $0x70] sm:$0xff]
    %v431 = vld [vmem:[#allocation2 + $0x78] sm:$0xff]
    %v432 = vpack.c.bf16 %v417, %v416
    %v433 = vpack.c.bf16 %v419, %v418
    %v434 = vpack.c.bf16 %v421, %v420
    %v435 = vpack.c.bf16 %v423, %v422
    %v436 = vpack.c.bf16 %v425, %v424
    %v437 = vpack.c.bf16 %v427, %v426
    %v438 = vpack.c.bf16 %v429, %v428
    %v439 = vpack.c.bf16 %v431, %v430
    %s440 = scalar_lea.vmem [#allocation3], 64
    %v441 = vld [vmem:[%s440] sm:$0xf]
    %v442 = vld [vmem:[%s440 + $0x4] sm:$0xf]
    %v443 = vld [vmem:[%s440 + $0x8] sm:$0xf]
    %v444 = vld [vmem:[%s440 + $0xc] sm:$0xf]
    %v445 = vld [vmem:[%s440 + $0x10] sm:$0xf]
    %v446 = vld [vmem:[%s440 + $0x14] sm:$0xf]
    %v447 = vld [vmem:[%s440 + $0x18] sm:$0xf]
    %v448 = vld [vmem:[%s440 + $0x1c] sm:$0xf]
    %v449 = vld [vmem:[%s440 + $0x20] sm:$0xf]
    %v450 = vld [vmem:[%s440 + $0x24] sm:$0xf]
    %v451 = vld [vmem:[%s440 + $0x28] sm:$0xf]
    %v452 = vld [vmem:[%s440 + $0x2c] sm:$0xf]
    %v453 = vld [vmem:[%s440 + $0x30] sm:$0xf]
    %v454 = vld [vmem:[%s440 + $0x34] sm:$0xf]
    %v455 = vld [vmem:[%s440 + $0x38] sm:$0xf]
    %v456 = vld [vmem:[%s440 + $0x3c] sm:$0xf]
    %v473 = vunpack.c.l.b16 %v441
    %v474 = vunpack.c.l.b16 %v442
    %v475 = vunpack.c.l.b16 %v443
    %v476 = vunpack.c.l.b16 %v444
    %v477 = vunpack.c.l.b16 %v445
    %v478 = vunpack.c.l.b16 %v446
    %v479 = vunpack.c.l.b16 %v447
    %v480 = vunpack.c.l.b16 %v448
    %v481 = vunpack.c.l.b16 %v449
    %v482 = vunpack.c.l.b16 %v450
    %v483 = vunpack.c.l.b16 %v451
    %v484 = vunpack.c.l.b16 %v452
    %v485 = vunpack.c.l.b16 %v453
    %v486 = vunpack.c.l.b16 %v454
    %v487 = vunpack.c.l.b16 %v455
    %v488 = vunpack.c.l.b16 %v456
    %v489 = vpack.c.b16 %v474, %v473
    %v490 = vpack.c.b16 %v476, %v475
    %v491 = vpack.c.b16 %v478, %v477
    %v492 = vpack.c.b16 %v480, %v479
    %v493 = vpack.c.b16 %v482, %v481
    %v494 = vpack.c.b16 %v484, %v483
    %v495 = vpack.c.b16 %v486, %v485
    %v496 = vpack.c.b16 %v488, %v487
    %505 = vmatprep.subr.bf16.mxu0 0
    %506 = vmatpush1.bf16.msra.mxu0 %v489
    %507 = vmatprep.subr.bf16.mxu0 0
    %508 = vmatpush1.bf16.msra.mxu0 %v490
    %509 = vmatprep.subr.bf16.mxu0 0
    %510 = vmatpush1.bf16.msra.mxu0 %v491
    %511 = vmatprep.subr.bf16.mxu0 0
    %512 = vmatpush1.bf16.msra.mxu0 %v492
    %513 = vmatprep.subr.bf16.mxu0 0
    %514 = vmatpush1.bf16.msra.mxu0 %v493
    %515 = vmatprep.subr.bf16.mxu0 0
    %516 = vmatpush1.bf16.msra.mxu0 %v494
    %517 = vmatprep.subr.bf16.mxu0 0
    %518 = vmatpush1.bf16.msra.mxu0 %v495
    %519 = vmatprep.subr.bf16.mxu0 0
    %520 = vmatpush1.bf16.msra.mxu0 %v496
    %521 = vmatprep.subr.bf16.mxu0 0
    %522 = vmatpush1.bf16.msra.mxu0 0
    %523 = vmatprep.subr.bf16.mxu0 0
    %524 = vmatpush1.bf16.msra.mxu0 0
    %525 = vmatprep.subr.bf16.mxu0 0
    %526 = vmatpush1.bf16.msra.mxu0 0
    %527 = vmatprep.subr.bf16.mxu0 0
    %528 = vmatpush1.bf16.msra.mxu0 0
    %529 = vmatprep.subr.bf16.mxu0 0
    %530 = vmatpush1.bf16.msra.mxu0 0
    %531 = vmatprep.subr.bf16.mxu0 0
    %532 = vmatpush1.bf16.msra.mxu0 0
    %533 = vmatprep.subr.bf16.mxu0 0
    %534 = vmatpush1.bf16.msra.mxu0 0
    %535 = vmatprep.subr.bf16.mxu0 0
    %536 = vmatpush1.bf16.msra.mxu0 0
    %537 = vmatprep.mubr.bf16.mxu0 0
    %538 = vmatmul.mubr.bf16.gmra.mrb[0].mxu0 %v432
    %v539 = vpop.f32.mrb[0].mxu0
    %v540 = vadd.f32 0.0, %v539
    %v541 = vpop.f32.mrb[0].mxu0
    %v542 = vpop.f32.mrb[0].mxu0
    %v543 = vadd.f32 0.0, %v542
    %v544 = vpop.f32.mrb[0].mxu0
    %545 = vmatprep.mubr.bf16.mxu0 0
    %546 = vmatmul.mubr.bf16.gmra.mrb[0].mxu0 %v433
    %v547 = vpop.f32.mrb[0].mxu0
    %v548 = vadd.f32 0.0, %v547
    %v549 = vpop.f32.mrb[0].mxu0
    %v550 = vpop.f32.mrb[0].mxu0
    %v551 = vadd.f32 0.0, %v550
    %v552 = vpop.f32.mrb[0].mxu0
    %553 = vmatprep.mubr.bf16.mxu0 0
    %554 = vmatmul.mubr.bf16.gmra.mrb[0].mxu0 %v434
    %v555 = vpop.f32.mrb[0].mxu0
    %v556 = vadd.f32 0.0, %v555
    %v557 = vpop.f32.mrb[0].mxu0
    %v558 = vpop.f32.mrb[0].mxu0
    %v559 = vadd.f32 0.0, %v558
    %v560 = vpop.f32.mrb[0].mxu0
    %561 = vmatprep.mubr.bf16.mxu0 0
    %562 = vmatmul.mubr.bf16.gmra.mrb[0].mxu0 %v435
    %v563 = vpop.f32.mrb[0].mxu0
    %v564 = vadd.f32 0.0, %v563
    %v565 = vpop.f32.mrb[0].mxu0
    %v566 = vpop.f32.mrb[0].mxu0
    %v567 = vadd.f32 0.0, %v566
    %v568 = vpop.f32.mrb[0].mxu0
    %569 = vmatprep.mubr.bf16.mxu0 0
    %570 = vmatmul.mubr.bf16.gmra.mrb[0].mxu0 %v436
    %v571 = vpop.f32.mrb[0].mxu0
    %v572 = vadd.f32 0.0, %v571
    %v573 = vpop.f32.mrb[0].mxu0
    %v574 = vpop.f32.mrb[0].mxu0
    %v575 = vadd.f32 0.0, %v574
    %v576 = vpop.f32.mrb[0].mxu0
    %577 = vmatprep.mubr.bf16.mxu0 0
    %578 = vmatmul.mubr.bf16.gmra.mrb[0].mxu0 %v437
    %v579 = vpop.f32.mrb[0].mxu0
    %v580 = vadd.f32 0.0, %v579
    %v581 = vpop.f32.mrb[0].mxu0
    %v582 = vpop.f32.mrb[0].mxu0
    %v583 = vadd.f32 0.0, %v582
    %v584 = vpop.f32.mrb[0].mxu0
    %585 = vmatprep.mubr.bf16.mxu0 0
    %586 = vmatmul.mubr.bf16.gmra.mrb[0].mxu0 %v438
    %v587 = vpop.f32.mrb[0].mxu0
    %v588 = vadd.f32 0.0, %v587
    %v589 = vpop.f32.mrb[0].mxu0
    %v590 = vpop.f32.mrb[0].mxu0
    %v591 = vadd.f32 0.0, %v590
    %v592 = vpop.f32.mrb[0].mxu0
    %593 = vmatprep.mubr.bf16.mxu0 0
    %594 = vmatmul.mubr.bf16.gmra.mrb[0].mxu0 %v439
    %v595 = vpop.f32.mrb[0].mxu0
    %v596 = vadd.f32 0.0, %v595
    %v597 = vpop.f32.mrb[0].mxu0
    %v598 = vpop.f32.mrb[0].mxu0
    %v599 = vadd.f32 0.0, %v598
    %v600 = vpop.f32.mrb[0].mxu0
    %601 = vdwg.mxu0
    %v603 = vshrl.u32 %v55, 16
    %606 = vmatprep.subr.bf16.mxu0 0
    %607 = vmatpush1.bf16.xpose.msra.mxu0 %v432
    %608 = vmatprep.subr.bf16.mxu0 0
    %609 = vmatpush1.bf16.xpose.msra.mxu0 %v433
    %610 = vmatprep.subr.bf16.mxu0 0
    %611 = vmatpush1.bf16.xpose.msra.mxu0 %v434
    %612 = vmatprep.subr.bf16.mxu0 0
    %613 = vmatpush1.bf16.xpose.msra.mxu0 %v435
    %614 = vmatprep.subr.bf16.mxu0 0
    %615 = vmatpush1.bf16.xpose.msra.mxu0 %v436
    %616 = vmatprep.subr.bf16.mxu0 0
    %617 = vmatpush1.bf16.xpose.msra.mxu0 %v437
    %618 = vmatprep.subr.bf16.mxu0 0
    %619 = vmatpush1.bf16.xpose.msra.mxu0 %v438
    %620 = vmatprep.subr.bf16.mxu0 0
    %621 = vmatpush1.bf16.xpose.msra.mxu0 %v439
    %622 = vmatprep.subr.bf16.mxu0 0
    %623 = vmatpush1.bf16.xpose.msra.mxu0 0
    %624 = vmatprep.subr.bf16.mxu0 0
    %625 = vmatpush1.bf16.xpose.msra.mxu0 0
    %626 = vmatprep.subr.bf16.mxu0 0
    %627 = vmatpush1.bf16.xpose.msra.mxu0 0
    %628 = vmatprep.subr.bf16.mxu0 0
    %629 = vmatpush1.bf16.xpose.msra.mxu0 0
    %630 = vmatprep.subr.bf16.mxu0 0
    %631 = vmatpush1.bf16.xpose.msra.mxu0 0
    %632 = vmatprep.subr.bf16.mxu0 0
    %633 = vmatpush1.bf16.xpose.msra.mxu0 0
    %634 = vmatprep.subr.bf16.mxu0 0
    %635 = vmatpush1.bf16.xpose.msra.mxu0 0
    %636 = vmatprep.subr.bf16.mxu0 0
    %637 = vmatpush1.bf16.xpose.msra.mxu0 0
    %638 = vmatprep.mubr.bf16.mxu0 0
    %639 = vmatmul.mubr.bf16.gmra.mrb[0].mxu0 %v603
    %v640 = vpop.f32.mrb[0].mxu0
    %v641 = vadd.f32 0.0, %v640
    %v642 = vpop.f32.mrb[0].mxu0
    %v643 = vpop.f32.mrb[0].mxu0
    %v644 = vpop.f32.mrb[0].mxu0
    %645 = vdwg.mxu0
    %647 = vset.pattern.permute.xlu0 127
    %648 = vperm.xlu0 %647, %v540
    %v649 = vpop.permute.xlu0 %648
    %652 = vset.pattern.permute.xlu0 127
    %653 = vperm.xlu0 %652, %v543
    %v654 = vpop.permute.xlu0 %653
    %v656 = vlaneseq
    %v657 = vshrl.u32 %v656, 7
    %v658 = vsub.s32 0, %v657
    %v659 = vrot.slane %v641, %v658
    %v660 = vadd.f32 %v649, %v659
    %v661 = vadd.f32 %v654, %v659
    %vm662 = vcmp.gt.f32.partialorder %v660, 0.0
    %vm663 = vcmp.gt.f32.partialorder %v661, 0.0
    %v664 = vmul.f32 %v660, 0.2
    %v665 = vmul.f32 %v661, 0.2
    %v666 = vsel %vm662, %v660, %v664
    %v667 = vsel %vm663, %v661, %v665
    %v668 = vsel %vm52, %v666, -1e+30
    %v669 = vsel %vm53, %v667, -1e+30
    %670 = vmax.xlane.f32.xlu0 %v668
    %v671 = vpop.xlane.xlu0 %670
    %672 = vmax.xlane.f32.xlu0 %v669
    %v673 = vpop.xlane.xlu0 %672
    %v674 = vsub.f32 %v668, %v671
    %v675 = vsub.f32 %v669, %v673
    %v676 = vmul.f32 %v674, 1.442695
    %v677 = vpow.pop %v676
    %v678 = vmul.f32 %v675, 1.442695
    %v679 = vpow.pop %v678
    %680 = vadd.xlane.f32.xlu0 %v677
    %v681 = vpop.xlane.xlu0 %680
    %682 = vadd.xlane.f32.xlu0 %v679
    %v683 = vpop.xlane.xlu0 %682
    %v684 = vmax.f32 %v681, 1e-20
    %v685 = vmax.f32 %v683, 1e-20
    %v686 = vrcp.pop %v684
    %v687 = vrcp.pop %v685
    %v688 = vmul.f32 %v677, %v686
    %v689 = vmul.f32 %v679, %v687
    %v690 = vpack.c.bf16 %v689, %v688
    %v691 = vpack.c.bf16 %v543, %v540
    %v692 = vpack.c.bf16 %v551, %v548
    %v693 = vpack.c.bf16 %v559, %v556
    %v694 = vpack.c.bf16 %v567, %v564
    %v695 = vpack.c.bf16 %v575, %v572
    %v696 = vpack.c.bf16 %v583, %v580
    %v697 = vpack.c.bf16 %v591, %v588
    %v698 = vpack.c.bf16 %v599, %v596
    %v699 = vlaneseq
    %v700 = vshrl.u32 %v699, 7
    %v701 = vsub.s32 1, %v700
    %v702 = vrot.slane %v56, %v701
    %703 = vmatprep.subr.bf16.mxu0 0
    %704 = vmatpush1.bf16.msra.mxu0 %v691
    %705 = vmatprep.subr.bf16.mxu0 0
    %706 = vmatpush1.bf16.msra.mxu0 %v692
    %707 = vmatprep.subr.bf16.mxu0 0
    %708 = vmatpush1.bf16.msra.mxu0 %v693
    %709 = vmatprep.subr.bf16.mxu0 0
    %710 = vmatpush1.bf16.msra.mxu0 %v694
    %711 = vmatprep.subr.bf16.mxu0 0
    %712 = vmatpush1.bf16.msra.mxu0 %v695
    %713 = vmatprep.subr.bf16.mxu0 0
    %714 = vmatpush1.bf16.msra.mxu0 %v696
    %715 = vmatprep.subr.bf16.mxu0 0
    %716 = vmatpush1.bf16.msra.mxu0 %v697
    %717 = vmatprep.subr.bf16.mxu0 0
    %718 = vmatpush1.bf16.msra.mxu0 %v698
    %719 = vmatprep.subr.bf16.mxu0 0
    %720 = vmatpush1.bf16.msra.mxu0 0
    %721 = vmatprep.subr.bf16.mxu0 0
    %722 = vmatpush1.bf16.msra.mxu0 0
    %723 = vmatprep.subr.bf16.mxu0 0
    %724 = vmatpush1.bf16.msra.mxu0 0
    %725 = vmatprep.subr.bf16.mxu0 0
    %726 = vmatpush1.bf16.msra.mxu0 0
    %727 = vmatprep.subr.bf16.mxu0 0
    %728 = vmatpush1.bf16.msra.mxu0 0
    %729 = vmatprep.subr.bf16.mxu0 0
    %730 = vmatpush1.bf16.msra.mxu0 0
    %731 = vmatprep.subr.bf16.mxu0 0
    %732 = vmatpush1.bf16.msra.mxu0 0
    %733 = vmatprep.subr.bf16.mxu0 0
    %734 = vmatpush1.bf16.msra.mxu0 0
    %735 = vmatprep.mubr.bf16.mxu0 0
    %736 = vmatmul.mubr.bf16.gmra.mrb[0].mxu0 %v690
    %v737 = vpop.f32.mrb[0].mxu0
    %v738 = vadd.f32 %v702, %v737
    %v739 = vpop.f32.mrb[0].mxu0
    %v740 = vpop.f32.mrb[0].mxu0
    %v741 = vadd.f32 %v702, %v740
    %v742 = vpop.f32.mrb[0].mxu0
    %743 = vdwg.mxu0
    %v744 = vmax.f32 %v738, 0.0
    %v745 = vmax.f32 %v741, 0.0
    %746 = vst [vmem:[#allocation2] sm:$0xff] %v744
    %747 = vst [vmem:[#allocation2 + $0x8] sm:$0xff] %v745
    %v748 = vld [vmem:[#allocation2] sm:$0xff]
    %v749 = vld [vmem:[#allocation2 + $0x8] sm:$0xff]
    %v750 = vld [vmem:[#allocation2 + $0x10] sm:$0xff]
    %v751 = vld [vmem:[#allocation2 + $0x18] sm:$0xff]
    %v752 = vld [vmem:[#allocation2 + $0x20] sm:$0xff]
    %v753 = vld [vmem:[#allocation2 + $0x28] sm:$0xff]
    %v754 = vld [vmem:[#allocation2 + $0x30] sm:$0xff]
    %v755 = vld [vmem:[#allocation2 + $0x38] sm:$0xff]
    %v756 = vld [vmem:[#allocation2 + $0x40] sm:$0xff]
    %v757 = vld [vmem:[#allocation2 + $0x48] sm:$0xff]
    %v758 = vld [vmem:[#allocation2 + $0x50] sm:$0xff]
    %v759 = vld [vmem:[#allocation2 + $0x58] sm:$0xff]
    %v760 = vld [vmem:[#allocation2 + $0x60] sm:$0xff]
    %v761 = vld [vmem:[#allocation2 + $0x68] sm:$0xff]
    %v762 = vld [vmem:[#allocation2 + $0x70] sm:$0xff]
    %v763 = vld [vmem:[#allocation2 + $0x78] sm:$0xff]
    %v764 = vpack.c.bf16 %v749, %v748
    %v765 = vpack.c.bf16 %v751, %v750
    %v766 = vpack.c.bf16 %v753, %v752
    %v767 = vpack.c.bf16 %v755, %v754
    %v768 = vpack.c.bf16 %v757, %v756
    %v769 = vpack.c.bf16 %v759, %v758
    %v770 = vpack.c.bf16 %v761, %v760
    %v771 = vpack.c.bf16 %v763, %v762
    %s772 = scalar_lea.vmem [#allocation3], 128
    %v773 = vld [vmem:[%s772] sm:$0xf]
    %v774 = vld [vmem:[%s772 + $0x4] sm:$0xf]
    %v775 = vld [vmem:[%s772 + $0x8] sm:$0xf]
    %v776 = vld [vmem:[%s772 + $0xc] sm:$0xf]
    %v777 = vld [vmem:[%s772 + $0x10] sm:$0xf]
    %v778 = vld [vmem:[%s772 + $0x14] sm:$0xf]
    %v779 = vld [vmem:[%s772 + $0x18] sm:$0xf]
    %v780 = vld [vmem:[%s772 + $0x1c] sm:$0xf]
    %v781 = vld [vmem:[%s772 + $0x20] sm:$0xf]
    %v782 = vld [vmem:[%s772 + $0x24] sm:$0xf]
    %v783 = vld [vmem:[%s772 + $0x28] sm:$0xf]
    %v784 = vld [vmem:[%s772 + $0x2c] sm:$0xf]
    %v785 = vld [vmem:[%s772 + $0x30] sm:$0xf]
    %v786 = vld [vmem:[%s772 + $0x34] sm:$0xf]
    %v787 = vld [vmem:[%s772 + $0x38] sm:$0xf]
    %v788 = vld [vmem:[%s772 + $0x3c] sm:$0xf]
    %v805 = vunpack.c.l.b16 %v773
    %v806 = vunpack.c.l.b16 %v774
    %v807 = vunpack.c.l.b16 %v775
    %v808 = vunpack.c.l.b16 %v776
    %v809 = vunpack.c.l.b16 %v777
    %v810 = vunpack.c.l.b16 %v778
    %v811 = vunpack.c.l.b16 %v779
    %v812 = vunpack.c.l.b16 %v780
    %v813 = vunpack.c.l.b16 %v781
    %v814 = vunpack.c.l.b16 %v782
    %v815 = vunpack.c.l.b16 %v783
    %v816 = vunpack.c.l.b16 %v784
    %v817 = vunpack.c.l.b16 %v785
    %v818 = vunpack.c.l.b16 %v786
    %v819 = vunpack.c.l.b16 %v787
    %v820 = vunpack.c.l.b16 %v788
    %v821 = vpack.c.b16 %v806, %v805
    %v822 = vpack.c.b16 %v808, %v807
    %v823 = vpack.c.b16 %v810, %v809
    %v824 = vpack.c.b16 %v812, %v811
    %v825 = vpack.c.b16 %v814, %v813
    %v826 = vpack.c.b16 %v816, %v815
    %v827 = vpack.c.b16 %v818, %v817
    %v828 = vpack.c.b16 %v820, %v819
    %837 = vmatprep.subr.bf16.mxu0 0
    %838 = vmatpush1.bf16.msra.mxu0 %v821
    %839 = vmatprep.subr.bf16.mxu0 0
    %840 = vmatpush1.bf16.msra.mxu0 %v822
    %841 = vmatprep.subr.bf16.mxu0 0
    %842 = vmatpush1.bf16.msra.mxu0 %v823
    %843 = vmatprep.subr.bf16.mxu0 0
    %844 = vmatpush1.bf16.msra.mxu0 %v824
    %845 = vmatprep.subr.bf16.mxu0 0
    %846 = vmatpush1.bf16.msra.mxu0 %v825
    %847 = vmatprep.subr.bf16.mxu0 0
    %848 = vmatpush1.bf16.msra.mxu0 %v826
    %849 = vmatprep.subr.bf16.mxu0 0
    %850 = vmatpush1.bf16.msra.mxu0 %v827
    %851 = vmatprep.subr.bf16.mxu0 0
    %852 = vmatpush1.bf16.msra.mxu0 %v828
    %853 = vmatprep.subr.bf16.mxu0 0
    %854 = vmatpush1.bf16.msra.mxu0 0
    %855 = vmatprep.subr.bf16.mxu0 0
    %856 = vmatpush1.bf16.msra.mxu0 0
    %857 = vmatprep.subr.bf16.mxu0 0
    %858 = vmatpush1.bf16.msra.mxu0 0
    %859 = vmatprep.subr.bf16.mxu0 0
    %860 = vmatpush1.bf16.msra.mxu0 0
    %861 = vmatprep.subr.bf16.mxu0 0
    %862 = vmatpush1.bf16.msra.mxu0 0
    %863 = vmatprep.subr.bf16.mxu0 0
    %864 = vmatpush1.bf16.msra.mxu0 0
    %865 = vmatprep.subr.bf16.mxu0 0
    %866 = vmatpush1.bf16.msra.mxu0 0
    %867 = vmatprep.subr.bf16.mxu0 0
    %868 = vmatpush1.bf16.msra.mxu0 0
    %869 = vmatprep.mubr.bf16.mxu0 0
    %870 = vmatmul.mubr.bf16.gmra.mrb[0].mxu0 %v764
    %v871 = vpop.f32.mrb[0].mxu0
    %v872 = vadd.f32 0.0, %v871
    %v873 = vpop.f32.mrb[0].mxu0
    %v874 = vpop.f32.mrb[0].mxu0
    %v875 = vadd.f32 0.0, %v874
    %v876 = vpop.f32.mrb[0].mxu0
    %877 = vmatprep.mubr.bf16.mxu0 0
    %878 = vmatmul.mubr.bf16.gmra.mrb[0].mxu0 %v765
    %v879 = vpop.f32.mrb[0].mxu0
    %v880 = vadd.f32 0.0, %v879
    %v881 = vpop.f32.mrb[0].mxu0
    %v882 = vpop.f32.mrb[0].mxu0
    %v883 = vadd.f32 0.0, %v882
    %v884 = vpop.f32.mrb[0].mxu0
    %885 = vmatprep.mubr.bf16.mxu0 0
    %886 = vmatmul.mubr.bf16.gmra.mrb[0].mxu0 %v766
    %v887 = vpop.f32.mrb[0].mxu0
    %v888 = vadd.f32 0.0, %v887
    %v889 = vpop.f32.mrb[0].mxu0
    %v890 = vpop.f32.mrb[0].mxu0
    %v891 = vadd.f32 0.0, %v890
    %v892 = vpop.f32.mrb[0].mxu0
    %893 = vmatprep.mubr.bf16.mxu0 0
    %894 = vmatmul.mubr.bf16.gmra.mrb[0].mxu0 %v767
    %v895 = vpop.f32.mrb[0].mxu0
    %v896 = vadd.f32 0.0, %v895
    %v897 = vpop.f32.mrb[0].mxu0
    %v898 = vpop.f32.mrb[0].mxu0
    %v899 = vadd.f32 0.0, %v898
    %v900 = vpop.f32.mrb[0].mxu0
    %901 = vmatprep.mubr.bf16.mxu0 0
    %902 = vmatmul.mubr.bf16.gmra.mrb[0].mxu0 %v768
    %v903 = vpop.f32.mrb[0].mxu0
    %v904 = vadd.f32 0.0, %v903
    %v905 = vpop.f32.mrb[0].mxu0
    %v906 = vpop.f32.mrb[0].mxu0
    %v907 = vadd.f32 0.0, %v906
    %v908 = vpop.f32.mrb[0].mxu0
    %909 = vmatprep.mubr.bf16.mxu0 0
    %910 = vmatmul.mubr.bf16.gmra.mrb[0].mxu0 %v769
    %v911 = vpop.f32.mrb[0].mxu0
    %v912 = vadd.f32 0.0, %v911
    %v913 = vpop.f32.mrb[0].mxu0
    %v914 = vpop.f32.mrb[0].mxu0
    %v915 = vadd.f32 0.0, %v914
    %v916 = vpop.f32.mrb[0].mxu0
    %917 = vmatprep.mubr.bf16.mxu0 0
    %918 = vmatmul.mubr.bf16.gmra.mrb[0].mxu0 %v770
    %v919 = vpop.f32.mrb[0].mxu0
    %v920 = vadd.f32 0.0, %v919
    %v921 = vpop.f32.mrb[0].mxu0
    %v922 = vpop.f32.mrb[0].mxu0
    %v923 = vadd.f32 0.0, %v922
    %v924 = vpop.f32.mrb[0].mxu0
    %925 = vmatprep.mubr.bf16.mxu0 0
    %926 = vmatmul.mubr.bf16.gmra.mrb[0].mxu0 %v771
    %v927 = vpop.f32.mrb[0].mxu0
    %v928 = vadd.f32 0.0, %v927
    %v929 = vpop.f32.mrb[0].mxu0
    %v930 = vpop.f32.mrb[0].mxu0
    %v931 = vadd.f32 0.0, %v930
    %v932 = vpop.f32.mrb[0].mxu0
    %933 = vdwg.mxu0
    %v935 = vrot.slane %v55, 1
    %937 = vmatprep.subr.bf16.mxu0 0
    %938 = vmatpush1.bf16.xpose.msra.mxu0 %v764
    %939 = vmatprep.subr.bf16.mxu0 0
    %940 = vmatpush1.bf16.xpose.msra.mxu0 %v765
    %941 = vmatprep.subr.bf16.mxu0 0
    %942 = vmatpush1.bf16.xpose.msra.mxu0 %v766
    %943 = vmatprep.subr.bf16.mxu0 0
    %944 = vmatpush1.bf16.xpose.msra.mxu0 %v767
    %945 = vmatprep.subr.bf16.mxu0 0
    %946 = vmatpush1.bf16.xpose.msra.mxu0 %v768
    %947 = vmatprep.subr.bf16.mxu0 0
    %948 = vmatpush1.bf16.xpose.msra.mxu0 %v769
    %949 = vmatprep.subr.bf16.mxu0 0
    %950 = vmatpush1.bf16.xpose.msra.mxu0 %v770
    %951 = vmatprep.subr.bf16.mxu0 0
    %952 = vmatpush1.bf16.xpose.msra.mxu0 %v771
    %953 = vmatprep.subr.bf16.mxu0 0
    %954 = vmatpush1.bf16.xpose.msra.mxu0 0
    %955 = vmatprep.subr.bf16.mxu0 0
    %956 = vmatpush1.bf16.xpose.msra.mxu0 0
    %957 = vmatprep.subr.bf16.mxu0 0
    %958 = vmatpush1.bf16.xpose.msra.mxu0 0
    %959 = vmatprep.subr.bf16.mxu0 0
    %960 = vmatpush1.bf16.xpose.msra.mxu0 0
    %961 = vmatprep.subr.bf16.mxu0 0
    %962 = vmatpush1.bf16.xpose.msra.mxu0 0
    %963 = vmatprep.subr.bf16.mxu0 0
    %964 = vmatpush1.bf16.xpose.msra.mxu0 0
    %965 = vmatprep.subr.bf16.mxu0 0
    %966 = vmatpush1.bf16.xpose.msra.mxu0 0
    %967 = vmatprep.subr.bf16.mxu0 0
    %968 = vmatpush1.bf16.xpose.msra.mxu0 0
    %969 = vmatprep.mubr.bf16.mxu0 0
    %970 = vmatmul.mubr.bf16.gmra.mrb[0].mxu0 %v935
    %v971 = vpop.f32.mrb[0].mxu0
    %v972 = vadd.f32 0.0, %v971
    %v973 = vpop.f32.mrb[0].mxu0
    %v974 = vpop.f32.mrb[0].mxu0
    %v975 = vpop.f32.mrb[0].mxu0
    %976 = vdwg.mxu0
    %978 = vset.pattern.permute.xlu0 127
    %979 = vperm.xlu0 %978, %v872
    %v980 = vpop.permute.xlu0 %979
    %983 = vset.pattern.permute.xlu0 127
    %984 = vperm.xlu0 %983, %v875
    %v985 = vpop.permute.xlu0 %984
    %v987 = vlaneseq
    %v988 = vshrl.u32 %v987, 7
    %v989 = vsub.s32 0, %v988
    %v990 = vrot.slane %v972, %v989
    %v991 = vadd.f32 %v980, %v990
    %v992 = vadd.f32 %v985, %v990
    %vm993 = vcmp.gt.f32.partialorder %v991, 0.0
    %vm994 = vcmp.gt.f32.partialorder %v992, 0.0
    %v995 = vmul.f32 %v991, 0.2
    %v996 = vmul.f32 %v992, 0.2
    %v997 = vsel %vm993, %v991, %v995
    %v998 = vsel %vm994, %v992, %v996
    %v999 = vsel %vm52, %v997, -1e+30
    %v1000 = vsel %vm53, %v998, -1e+30
    %1001 = vmax.xlane.f32.xlu0 %v999
    %v1002 = vpop.xlane.xlu0 %1001
    %1003 = vmax.xlane.f32.xlu0 %v1000
    %v1004 = vpop.xlane.xlu0 %1003
    %v1005 = vsub.f32 %v999, %v1002
    %v1006 = vsub.f32 %v1000, %v1004
    %v1007 = vmul.f32 %v1005, 1.442695
    %v1008 = vpow.pop %v1007
    %v1009 = vmul.f32 %v1006, 1.442695
    %v1010 = vpow.pop %v1009
    %1011 = vadd.xlane.f32.xlu0 %v1008
    %v1012 = vpop.xlane.xlu0 %1011
    %1013 = vadd.xlane.f32.xlu0 %v1010
    %v1014 = vpop.xlane.xlu0 %1013
    %v1015 = vmax.f32 %v1012, 1e-20
    %v1016 = vmax.f32 %v1014, 1e-20
    %v1017 = vrcp.pop %v1015
    %v1018 = vrcp.pop %v1016
    %v1019 = vmul.f32 %v1008, %v1017
    %v1020 = vmul.f32 %v1010, %v1018
    %v1021 = vpack.c.bf16 %v1020, %v1019
    %v1022 = vpack.c.bf16 %v875, %v872
    %v1023 = vpack.c.bf16 %v883, %v880
    %v1024 = vpack.c.bf16 %v891, %v888
    %v1025 = vpack.c.bf16 %v899, %v896
    %v1026 = vpack.c.bf16 %v907, %v904
    %v1027 = vpack.c.bf16 %v915, %v912
    %v1028 = vpack.c.bf16 %v923, %v920
    %v1029 = vpack.c.bf16 %v931, %v928
    %v1030 = vlaneseq
    %v1031 = vshrl.u32 %v1030, 7
    %v1032 = vsub.s32 2, %v1031
    %v1033 = vrot.slane %v56, %v1032
    %1034 = vmatprep.subr.bf16.mxu0 0
    %1035 = vmatpush1.bf16.msra.mxu0 %v1022
    %1036 = vmatprep.subr.bf16.mxu0 0
    %1037 = vmatpush1.bf16.msra.mxu0 %v1023
    %1038 = vmatprep.subr.bf16.mxu0 0
    %1039 = vmatpush1.bf16.msra.mxu0 %v1024
    %1040 = vmatprep.subr.bf16.mxu0 0
    %1041 = vmatpush1.bf16.msra.mxu0 %v1025
    %1042 = vmatprep.subr.bf16.mxu0 0
    %1043 = vmatpush1.bf16.msra.mxu0 %v1026
    %1044 = vmatprep.subr.bf16.mxu0 0
    %1045 = vmatpush1.bf16.msra.mxu0 %v1027
    %1046 = vmatprep.subr.bf16.mxu0 0
    %1047 = vmatpush1.bf16.msra.mxu0 %v1028
    %1048 = vmatprep.subr.bf16.mxu0 0
    %1049 = vmatpush1.bf16.msra.mxu0 %v1029
    %1050 = vmatprep.subr.bf16.mxu0 0
    %1051 = vmatpush1.bf16.msra.mxu0 0
    %1052 = vmatprep.subr.bf16.mxu0 0
    %1053 = vmatpush1.bf16.msra.mxu0 0
    %1054 = vmatprep.subr.bf16.mxu0 0
    %1055 = vmatpush1.bf16.msra.mxu0 0
    %1056 = vmatprep.subr.bf16.mxu0 0
    %1057 = vmatpush1.bf16.msra.mxu0 0
    %1058 = vmatprep.subr.bf16.mxu0 0
    %1059 = vmatpush1.bf16.msra.mxu0 0
    %1060 = vmatprep.subr.bf16.mxu0 0
    %1061 = vmatpush1.bf16.msra.mxu0 0
    %1062 = vmatprep.subr.bf16.mxu0 0
    %1063 = vmatpush1.bf16.msra.mxu0 0
    %1064 = vmatprep.subr.bf16.mxu0 0
    %1065 = vmatpush1.bf16.msra.mxu0 0
    %1066 = vmatprep.mubr.bf16.mxu0 0
    %1067 = vmatmul.mubr.bf16.gmra.mrb[0].mxu0 %v1021
    %v1068 = vpop.f32.mrb[0].mxu0
    %v1069 = vadd.f32 %v1033, %v1068
    %v1070 = vpop.f32.mrb[0].mxu0
    %v1071 = vpop.f32.mrb[0].mxu0
    %v1072 = vadd.f32 %v1033, %v1071
    %v1073 = vpop.f32.mrb[0].mxu0
    %1074 = vdwg.mxu0
    %v1075 = vmax.f32 %v1069, 0.0
    %v1076 = vmax.f32 %v1072, 0.0
    %1077 = vst [vmem:[#allocation2] sm:$0xff] %v1075
    %1078 = vst [vmem:[#allocation2 + $0x8] sm:$0xff] %v1076
    %v1079 = vld [vmem:[#allocation2] sm:$0xff]
    %v1080 = vld [vmem:[#allocation2 + $0x8] sm:$0xff]
    %v1081 = vld [vmem:[#allocation2 + $0x10] sm:$0xff]
    %v1082 = vld [vmem:[#allocation2 + $0x18] sm:$0xff]
    %v1083 = vld [vmem:[#allocation2 + $0x20] sm:$0xff]
    %v1084 = vld [vmem:[#allocation2 + $0x28] sm:$0xff]
    %v1085 = vld [vmem:[#allocation2 + $0x30] sm:$0xff]
    %v1086 = vld [vmem:[#allocation2 + $0x38] sm:$0xff]
    %v1087 = vld [vmem:[#allocation2 + $0x40] sm:$0xff]
    %v1088 = vld [vmem:[#allocation2 + $0x48] sm:$0xff]
    %v1089 = vld [vmem:[#allocation2 + $0x50] sm:$0xff]
    %v1090 = vld [vmem:[#allocation2 + $0x58] sm:$0xff]
    %v1091 = vld [vmem:[#allocation2 + $0x60] sm:$0xff]
    %v1092 = vld [vmem:[#allocation2 + $0x68] sm:$0xff]
    %v1093 = vld [vmem:[#allocation2 + $0x70] sm:$0xff]
    %v1094 = vld [vmem:[#allocation2 + $0x78] sm:$0xff]
    %v1095 = vpack.c.bf16 %v1080, %v1079
    %v1096 = vpack.c.bf16 %v1082, %v1081
    %v1097 = vpack.c.bf16 %v1084, %v1083
    %v1098 = vpack.c.bf16 %v1086, %v1085
    %v1099 = vpack.c.bf16 %v1088, %v1087
    %v1100 = vpack.c.bf16 %v1090, %v1089
    %v1101 = vpack.c.bf16 %v1092, %v1091
    %v1102 = vpack.c.bf16 %v1094, %v1093
    %s1103 = scalar_lea.vmem [#allocation3], 192
    %v1104 = vld [vmem:[%s1103] sm:$0xf]
    %v1105 = vld [vmem:[%s1103 + $0x4] sm:$0xf]
    %v1106 = vld [vmem:[%s1103 + $0x8] sm:$0xf]
    %v1107 = vld [vmem:[%s1103 + $0xc] sm:$0xf]
    %v1108 = vld [vmem:[%s1103 + $0x10] sm:$0xf]
    %v1109 = vld [vmem:[%s1103 + $0x14] sm:$0xf]
    %v1110 = vld [vmem:[%s1103 + $0x18] sm:$0xf]
    %v1111 = vld [vmem:[%s1103 + $0x1c] sm:$0xf]
    %v1112 = vld [vmem:[%s1103 + $0x20] sm:$0xf]
    %v1113 = vld [vmem:[%s1103 + $0x24] sm:$0xf]
    %v1114 = vld [vmem:[%s1103 + $0x28] sm:$0xf]
    %v1115 = vld [vmem:[%s1103 + $0x2c] sm:$0xf]
    %v1116 = vld [vmem:[%s1103 + $0x30] sm:$0xf]
    %v1117 = vld [vmem:[%s1103 + $0x34] sm:$0xf]
    %v1118 = vld [vmem:[%s1103 + $0x38] sm:$0xf]
    %v1119 = vld [vmem:[%s1103 + $0x3c] sm:$0xf]
    %v1136 = vunpack.c.l.b16 %v1104
    %v1137 = vunpack.c.l.b16 %v1105
    %v1138 = vunpack.c.l.b16 %v1106
    %v1139 = vunpack.c.l.b16 %v1107
    %v1140 = vunpack.c.l.b16 %v1108
    %v1141 = vunpack.c.l.b16 %v1109
    %v1142 = vunpack.c.l.b16 %v1110
    %v1143 = vunpack.c.l.b16 %v1111
    %v1144 = vunpack.c.l.b16 %v1112
    %v1145 = vunpack.c.l.b16 %v1113
    %v1146 = vunpack.c.l.b16 %v1114
    %v1147 = vunpack.c.l.b16 %v1115
    %v1148 = vunpack.c.l.b16 %v1116
    %v1149 = vunpack.c.l.b16 %v1117
    %v1150 = vunpack.c.l.b16 %v1118
    %v1151 = vunpack.c.l.b16 %v1119
    %v1152 = vpack.c.b16 %v1137, %v1136
    %v1153 = vpack.c.b16 %v1139, %v1138
    %v1154 = vpack.c.b16 %v1141, %v1140
    %v1155 = vpack.c.b16 %v1143, %v1142
    %v1156 = vpack.c.b16 %v1145, %v1144
    %v1157 = vpack.c.b16 %v1147, %v1146
    %v1158 = vpack.c.b16 %v1149, %v1148
    %v1159 = vpack.c.b16 %v1151, %v1150
    %1168 = vmatprep.subr.bf16.mxu0 0
    %1169 = vmatpush1.bf16.msra.mxu0 %v1152
    %1170 = vmatprep.subr.bf16.mxu0 0
    %1171 = vmatpush1.bf16.msra.mxu0 %v1153
    %1172 = vmatprep.subr.bf16.mxu0 0
    %1173 = vmatpush1.bf16.msra.mxu0 %v1154
    %1174 = vmatprep.subr.bf16.mxu0 0
    %1175 = vmatpush1.bf16.msra.mxu0 %v1155
    %1176 = vmatprep.subr.bf16.mxu0 0
    %1177 = vmatpush1.bf16.msra.mxu0 %v1156
    %1178 = vmatprep.subr.bf16.mxu0 0
    %1179 = vmatpush1.bf16.msra.mxu0 %v1157
    %1180 = vmatprep.subr.bf16.mxu0 0
    %1181 = vmatpush1.bf16.msra.mxu0 %v1158
    %1182 = vmatprep.subr.bf16.mxu0 0
    %1183 = vmatpush1.bf16.msra.mxu0 %v1159
    %1184 = vmatprep.subr.bf16.mxu0 0
    %1185 = vmatpush1.bf16.msra.mxu0 0
    %1186 = vmatprep.subr.bf16.mxu0 0
    %1187 = vmatpush1.bf16.msra.mxu0 0
    %1188 = vmatprep.subr.bf16.mxu0 0
    %1189 = vmatpush1.bf16.msra.mxu0 0
    %1190 = vmatprep.subr.bf16.mxu0 0
    %1191 = vmatpush1.bf16.msra.mxu0 0
    %1192 = vmatprep.subr.bf16.mxu0 0
    %1193 = vmatpush1.bf16.msra.mxu0 0
    %1194 = vmatprep.subr.bf16.mxu0 0
    %1195 = vmatpush1.bf16.msra.mxu0 0
    %1196 = vmatprep.subr.bf16.mxu0 0
    %1197 = vmatpush1.bf16.msra.mxu0 0
    %1198 = vmatprep.subr.bf16.mxu0 0
    %1199 = vmatpush1.bf16.msra.mxu0 0
    %1200 = vmatprep.mubr.bf16.mxu0 0
    %1201 = vmatmul.mubr.bf16.gmra.mrb[0].mxu0 %v1095
    %v1202 = vpop.f32.mrb[0].mxu0
    %v1203 = vadd.f32 0.0, %v1202
    %v1204 = vpop.f32.mrb[0].mxu0
    %v1205 = vpop.f32.mrb[0].mxu0
    %v1206 = vadd.f32 0.0, %v1205
    %v1207 = vpop.f32.mrb[0].mxu0
    %1208 = vmatprep.mubr.bf16.mxu0 0
    %1209 = vmatmul.mubr.bf16.gmra.mrb[0].mxu0 %v1096
    %v1210 = vpop.f32.mrb[0].mxu0
    %v1211 = vadd.f32 0.0, %v1210
    %v1212 = vpop.f32.mrb[0].mxu0
    %v1213 = vpop.f32.mrb[0].mxu0
    %v1214 = vadd.f32 0.0, %v1213
    %v1215 = vpop.f32.mrb[0].mxu0
    %1216 = vmatprep.mubr.bf16.mxu0 0
    %1217 = vmatmul.mubr.bf16.gmra.mrb[0].mxu0 %v1097
    %v1218 = vpop.f32.mrb[0].mxu0
    %v1219 = vadd.f32 0.0, %v1218
    %v1220 = vpop.f32.mrb[0].mxu0
    %v1221 = vpop.f32.mrb[0].mxu0
    %v1222 = vadd.f32 0.0, %v1221
    %v1223 = vpop.f32.mrb[0].mxu0
    %1224 = vmatprep.mubr.bf16.mxu0 0
    %1225 = vmatmul.mubr.bf16.gmra.mrb[0].mxu0 %v1098
    %v1226 = vpop.f32.mrb[0].mxu0
    %v1227 = vadd.f32 0.0, %v1226
    %v1228 = vpop.f32.mrb[0].mxu0
    %v1229 = vpop.f32.mrb[0].mxu0
    %v1230 = vadd.f32 0.0, %v1229
    %v1231 = vpop.f32.mrb[0].mxu0
    %1232 = vmatprep.mubr.bf16.mxu0 0
    %1233 = vmatmul.mubr.bf16.gmra.mrb[0].mxu0 %v1099
    %v1234 = vpop.f32.mrb[0].mxu0
    %v1235 = vadd.f32 0.0, %v1234
    %v1236 = vpop.f32.mrb[0].mxu0
    %v1237 = vpop.f32.mrb[0].mxu0
    %v1238 = vadd.f32 0.0, %v1237
    %v1239 = vpop.f32.mrb[0].mxu0
    %1240 = vmatprep.mubr.bf16.mxu0 0
    %1241 = vmatmul.mubr.bf16.gmra.mrb[0].mxu0 %v1100
    %v1242 = vpop.f32.mrb[0].mxu0
    %v1243 = vadd.f32 0.0, %v1242
    %v1244 = vpop.f32.mrb[0].mxu0
    %v1245 = vpop.f32.mrb[0].mxu0
    %v1246 = vadd.f32 0.0, %v1245
    %v1247 = vpop.f32.mrb[0].mxu0
    %1248 = vmatprep.mubr.bf16.mxu0 0
    %1249 = vmatmul.mubr.bf16.gmra.mrb[0].mxu0 %v1101
    %v1250 = vpop.f32.mrb[0].mxu0
    %v1251 = vadd.f32 0.0, %v1250
    %v1252 = vpop.f32.mrb[0].mxu0
    %v1253 = vpop.f32.mrb[0].mxu0
    %v1254 = vadd.f32 0.0, %v1253
    %v1255 = vpop.f32.mrb[0].mxu0
    %1256 = vmatprep.mubr.bf16.mxu0 0
    %1257 = vmatmul.mubr.bf16.gmra.mrb[0].mxu0 %v1102
    %v1258 = vpop.f32.mrb[0].mxu0
    %v1259 = vadd.f32 0.0, %v1258
    %v1260 = vpop.f32.mrb[0].mxu0
    %v1261 = vpop.f32.mrb[0].mxu0
    %v1262 = vadd.f32 0.0, %v1261
    %v1263 = vpop.f32.mrb[0].mxu0
    %1264 = vdwg.mxu0
    %v1265 = vrot.slane %v603, 1
    %1267 = vmatprep.subr.bf16.mxu0 0
    %1268 = vmatpush1.bf16.xpose.msra.mxu0 %v1095
    %1269 = vmatprep.subr.bf16.mxu0 0
    %1270 = vmatpush1.bf16.xpose.msra.mxu0 %v1096
    %1271 = vmatprep.subr.bf16.mxu0 0
    %1272 = vmatpush1.bf16.xpose.msra.mxu0 %v1097
    %1273 = vmatprep.subr.bf16.mxu0 0
    %1274 = vmatpush1.bf16.xpose.msra.mxu0 %v1098
    %1275 = vmatprep.subr.bf16.mxu0 0
    %1276 = vmatpush1.bf16.xpose.msra.mxu0 %v1099
    %1277 = vmatprep.subr.bf16.mxu0 0
    %1278 = vmatpush1.bf16.xpose.msra.mxu0 %v1100
    %1279 = vmatprep.subr.bf16.mxu0 0
    %1280 = vmatpush1.bf16.xpose.msra.mxu0 %v1101
    %1281 = vmatprep.subr.bf16.mxu0 0
    %1282 = vmatpush1.bf16.xpose.msra.mxu0 %v1102
    %1283 = vmatprep.subr.bf16.mxu0 0
    %1284 = vmatpush1.bf16.xpose.msra.mxu0 0
    %1285 = vmatprep.subr.bf16.mxu0 0
    %1286 = vmatpush1.bf16.xpose.msra.mxu0 0
    %1287 = vmatprep.subr.bf16.mxu0 0
    %1288 = vmatpush1.bf16.xpose.msra.mxu0 0
    %1289 = vmatprep.subr.bf16.mxu0 0
    %1290 = vmatpush1.bf16.xpose.msra.mxu0 0
    %1291 = vmatprep.subr.bf16.mxu0 0
    %1292 = vmatpush1.bf16.xpose.msra.mxu0 0
    %1293 = vmatprep.subr.bf16.mxu0 0
    %1294 = vmatpush1.bf16.xpose.msra.mxu0 0
    %1295 = vmatprep.subr.bf16.mxu0 0
    %1296 = vmatpush1.bf16.xpose.msra.mxu0 0
    %1297 = vmatprep.subr.bf16.mxu0 0
    %1298 = vmatpush1.bf16.xpose.msra.mxu0 0
    %1299 = vmatprep.mubr.bf16.mxu0 0
    %1300 = vmatmul.mubr.bf16.gmra.mrb[0].mxu0 %v1265
    %v1301 = vpop.f32.mrb[0].mxu0
    %v1302 = vadd.f32 0.0, %v1301
    %v1303 = vpop.f32.mrb[0].mxu0
    %v1304 = vpop.f32.mrb[0].mxu0
    %v1305 = vpop.f32.mrb[0].mxu0
    %1306 = vdwg.mxu0
    %1308 = vset.pattern.permute.xlu0 127
    %1309 = vperm.xlu0 %1308, %v1203
    %v1310 = vpop.permute.xlu0 %1309
    %1313 = vset.pattern.permute.xlu0 127
    %1314 = vperm.xlu0 %1313, %v1206
    %v1315 = vpop.permute.xlu0 %1314
    %v1317 = vlaneseq
    %v1318 = vshrl.u32 %v1317, 7
    %v1319 = vsub.s32 0, %v1318
    %v1320 = vrot.slane %v1302, %v1319
    %v1321 = vadd.f32 %v1310, %v1320
    %v1322 = vadd.f32 %v1315, %v1320
    %vm1323 = vcmp.gt.f32.partialorder %v1321, 0.0
    %vm1324 = vcmp.gt.f32.partialorder %v1322, 0.0
    %v1325 = vmul.f32 %v1321, 0.2
    %v1326 = vmul.f32 %v1322, 0.2
    %v1327 = vsel %vm1323, %v1321, %v1325
    %v1328 = vsel %vm1324, %v1322, %v1326
    %v1329 = vsel %vm52, %v1327, -1e+30
    %v1330 = vsel %vm53, %v1328, -1e+30
    %1331 = vmax.xlane.f32.xlu0 %v1329
    %v1332 = vpop.xlane.xlu0 %1331
    %1333 = vmax.xlane.f32.xlu0 %v1330
    %v1334 = vpop.xlane.xlu0 %1333
    %v1335 = vsub.f32 %v1329, %v1332
    %v1336 = vsub.f32 %v1330, %v1334
    %v1337 = vmul.f32 %v1335, 1.442695
    %v1338 = vpow.pop %v1337
    %v1339 = vmul.f32 %v1336, 1.442695
    %v1340 = vpow.pop %v1339
    %1341 = vadd.xlane.f32.xlu0 %v1338
    %v1342 = vpop.xlane.xlu0 %1341
    %1343 = vadd.xlane.f32.xlu0 %v1340
    %v1344 = vpop.xlane.xlu0 %1343
    %v1345 = vmax.f32 %v1342, 1e-20
    %v1346 = vmax.f32 %v1344, 1e-20
    %v1347 = vrcp.pop %v1345
    %v1348 = vrcp.pop %v1346
    %v1349 = vmul.f32 %v1338, %v1347
    %v1350 = vmul.f32 %v1340, %v1348
    %v1351 = vpack.c.bf16 %v1350, %v1349
    %v1352 = vpack.c.bf16 %v1206, %v1203
    %v1353 = vpack.c.bf16 %v1214, %v1211
    %v1354 = vpack.c.bf16 %v1222, %v1219
    %v1355 = vpack.c.bf16 %v1230, %v1227
    %v1356 = vpack.c.bf16 %v1238, %v1235
    %v1357 = vpack.c.bf16 %v1246, %v1243
    %v1358 = vpack.c.bf16 %v1254, %v1251
    %v1359 = vpack.c.bf16 %v1262, %v1259
    %v1360 = vlaneseq
    %v1361 = vshrl.u32 %v1360, 7
    %v1362 = vsub.s32 3, %v1361
    %v1363 = vrot.slane %v56, %v1362
    %1364 = vmatprep.subr.bf16.mxu0 0
    %1365 = vmatpush1.bf16.msra.mxu0 %v1352
    %1366 = vmatprep.subr.bf16.mxu0 0
    %1367 = vmatpush1.bf16.msra.mxu0 %v1353
    %1368 = vmatprep.subr.bf16.mxu0 0
    %1369 = vmatpush1.bf16.msra.mxu0 %v1354
    %1370 = vmatprep.subr.bf16.mxu0 0
    %1371 = vmatpush1.bf16.msra.mxu0 %v1355
    %1372 = vmatprep.subr.bf16.mxu0 0
    %1373 = vmatpush1.bf16.msra.mxu0 %v1356
    %1374 = vmatprep.subr.bf16.mxu0 0
    %1375 = vmatpush1.bf16.msra.mxu0 %v1357
    %1376 = vmatprep.subr.bf16.mxu0 0
    %1377 = vmatpush1.bf16.msra.mxu0 %v1358
    %1378 = vmatprep.subr.bf16.mxu0 0
    %1379 = vmatpush1.bf16.msra.mxu0 %v1359
    %1380 = vmatprep.subr.bf16.mxu0 0
    %1381 = vmatpush1.bf16.msra.mxu0 0
    %1382 = vmatprep.subr.bf16.mxu0 0
    %1383 = vmatpush1.bf16.msra.mxu0 0
    %1384 = vmatprep.subr.bf16.mxu0 0
    %1385 = vmatpush1.bf16.msra.mxu0 0
    %1386 = vmatprep.subr.bf16.mxu0 0
    %1387 = vmatpush1.bf16.msra.mxu0 0
    %1388 = vmatprep.subr.bf16.mxu0 0
    %1389 = vmatpush1.bf16.msra.mxu0 0
    %1390 = vmatprep.subr.bf16.mxu0 0
    %1391 = vmatpush1.bf16.msra.mxu0 0
    %1392 = vmatprep.subr.bf16.mxu0 0
    %1393 = vmatpush1.bf16.msra.mxu0 0
    %1394 = vmatprep.subr.bf16.mxu0 0
    %1395 = vmatpush1.bf16.msra.mxu0 0
    %1396 = vmatprep.mubr.bf16.mxu0 0
    %1397 = vmatmul.mubr.bf16.gmra.mrb[0].mxu0 %v1351
    %v1398 = vpop.f32.mrb[0].mxu0
    %v1399 = vadd.f32 %v1363, %v1398
    %v1400 = vpop.f32.mrb[0].mxu0
    %v1401 = vpop.f32.mrb[0].mxu0
    %v1402 = vadd.f32 %v1363, %v1401
    %v1403 = vpop.f32.mrb[0].mxu0
    %1404 = vdwg.mxu0
    %v1405 = vmax.f32 %v1399, 0.0
    %v1406 = vmax.f32 %v1402, 0.0
    %1407 = vst [vmem:[#allocation2] sm:$0xff] %v1405
    %1408 = vst [vmem:[#allocation2 + $0x8] sm:$0xff] %v1406
    %v1409 = vld [vmem:[#allocation2] sm:$0xff]
    %v1410 = vld [vmem:[#allocation2 + $0x8] sm:$0xff]
    %v1411 = vld [vmem:[#allocation2 + $0x10] sm:$0xff]
    %v1412 = vld [vmem:[#allocation2 + $0x18] sm:$0xff]
    %v1413 = vld [vmem:[#allocation2 + $0x20] sm:$0xff]
    %v1414 = vld [vmem:[#allocation2 + $0x28] sm:$0xff]
    %v1415 = vld [vmem:[#allocation2 + $0x30] sm:$0xff]
    %v1416 = vld [vmem:[#allocation2 + $0x38] sm:$0xff]
    %v1417 = vld [vmem:[#allocation2 + $0x40] sm:$0xff]
    %v1418 = vld [vmem:[#allocation2 + $0x48] sm:$0xff]
    %v1419 = vld [vmem:[#allocation2 + $0x50] sm:$0xff]
    %v1420 = vld [vmem:[#allocation2 + $0x58] sm:$0xff]
    %v1421 = vld [vmem:[#allocation2 + $0x60] sm:$0xff]
    %v1422 = vld [vmem:[#allocation2 + $0x68] sm:$0xff]
    %v1423 = vld [vmem:[#allocation2 + $0x70] sm:$0xff]
    %v1424 = vld [vmem:[#allocation2 + $0x78] sm:$0xff]
    %v1425 = vpack.c.bf16 %v1410, %v1409
    %v1426 = vpack.c.bf16 %v1412, %v1411
    %v1427 = vpack.c.bf16 %v1414, %v1413
    %v1428 = vpack.c.bf16 %v1416, %v1415
    %v1429 = vpack.c.bf16 %v1418, %v1417
    %v1430 = vpack.c.bf16 %v1420, %v1419
    %v1431 = vpack.c.bf16 %v1422, %v1421
    %v1432 = vpack.c.bf16 %v1424, %v1423
    %v1433 = vld [vmem:[%s5] sm:$0xff]
    %v1434 = vpack.c.bf16 %v1433, %v1433
    %1435 = vmatprep.subr.bf16.mxu0 0
    %1436 = vmatpush1.bf16.msra.mxu0 %v1425
    %1437 = vmatprep.subr.bf16.mxu0 0
    %1438 = vmatpush1.bf16.msra.mxu0 %v1426
    %1439 = vmatprep.subr.bf16.mxu0 0
    %1440 = vmatpush1.bf16.msra.mxu0 %v1427
    %1441 = vmatprep.subr.bf16.mxu0 0
    %1442 = vmatpush1.bf16.msra.mxu0 %v1428
    %1443 = vmatprep.subr.bf16.mxu0 0
    %1444 = vmatpush1.bf16.msra.mxu0 %v1429
    %1445 = vmatprep.subr.bf16.mxu0 0
    %1446 = vmatpush1.bf16.msra.mxu0 %v1430
    %1447 = vmatprep.subr.bf16.mxu0 0
    %1448 = vmatpush1.bf16.msra.mxu0 %v1431
    %1449 = vmatprep.subr.bf16.mxu0 0
    %1450 = vmatpush1.bf16.msra.mxu0 %v1432
    %1451 = vmatprep.subr.bf16.mxu0 0
    %1452 = vmatpush1.bf16.msra.mxu0 0
    %1453 = vmatprep.subr.bf16.mxu0 0
    %1454 = vmatpush1.bf16.msra.mxu0 0
    %1455 = vmatprep.subr.bf16.mxu0 0
    %1456 = vmatpush1.bf16.msra.mxu0 0
    %1457 = vmatprep.subr.bf16.mxu0 0
    %1458 = vmatpush1.bf16.msra.mxu0 0
    %1459 = vmatprep.subr.bf16.mxu0 0
    %1460 = vmatpush1.bf16.msra.mxu0 0
    %1461 = vmatprep.subr.bf16.mxu0 0
    %1462 = vmatpush1.bf16.msra.mxu0 0
    %1463 = vmatprep.subr.bf16.mxu0 0
    %1464 = vmatpush1.bf16.msra.mxu0 0
    %1465 = vmatprep.subr.bf16.mxu0 0
    %1466 = vmatpush1.bf16.msra.mxu0 0
    %1467 = vmatprep.mubr.bf16.mxu0 0
    %1468 = vmatmul.mubr.bf16.gmra.mrb[0].mxu0 %v1434
    %v1469 = vpop.f32.mrb[0].mxu0
    %v1470 = vadd.f32 0.0, %v1469
    %v1471 = vpop.f32.mrb[0].mxu0
    %v1472 = vpop.f32.mrb[0].mxu0
    %v1473 = vpop.f32.mrb[0].mxu0
    %1474 = vdwg.mxu0
    %v1475 = vpack.c.bf16 %v1470, %v1470
    %v1476 = vld [vmem:[%s6] sm:$0xf]
    %v1477 = vld [vmem:[%s6 + $0x4] sm:$0xf]
    %v1478 = vld [vmem:[%s6 + $0x8] sm:$0xf]
    %v1479 = vld [vmem:[%s6 + $0xc] sm:$0xf]
    %v1480 = vld [vmem:[%s6 + $0x10] sm:$0xf]
    %v1481 = vld [vmem:[%s6 + $0x14] sm:$0xf]
    %v1482 = vld [vmem:[%s6 + $0x18] sm:$0xf]
    %v1483 = vld [vmem:[%s6 + $0x1c] sm:$0xf]
    %v1484 = vld [vmem:[%s6 + $0x20] sm:$0xf]
    %v1485 = vld [vmem:[%s6 + $0x24] sm:$0xf]
    %v1486 = vld [vmem:[%s6 + $0x28] sm:$0xf]
    %v1487 = vld [vmem:[%s6 + $0x2c] sm:$0xf]
    %v1488 = vld [vmem:[%s6 + $0x30] sm:$0xf]
    %v1489 = vld [vmem:[%s6 + $0x34] sm:$0xf]
    %v1490 = vld [vmem:[%s6 + $0x38] sm:$0xf]
    %v1491 = vld [vmem:[%s6 + $0x3c] sm:$0xf]
    %v1492 = vld [vmem:[%s7] sm:$0x1]
    %v1494 = vlaneseq
    %v1495 = vshrl.u32 %v1494, 7
    %v1496 = vsub.s32 0, %v1495
    %v1497 = vrot.slane %v1492, %v1496
    %v1515 = vunpack.c.l.b16 %v1476
    %v1516 = vunpack.c.l.b16 %v1477
    %v1517 = vunpack.c.l.b16 %v1478
    %v1518 = vunpack.c.l.b16 %v1479
    %v1519 = vunpack.c.l.b16 %v1480
    %v1520 = vunpack.c.l.b16 %v1481
    %v1521 = vunpack.c.l.b16 %v1482
    %v1522 = vunpack.c.l.b16 %v1483
    %v1523 = vunpack.c.l.b16 %v1484
    %v1524 = vunpack.c.l.b16 %v1485
    %v1525 = vunpack.c.l.b16 %v1486
    %v1526 = vunpack.c.l.b16 %v1487
    %v1527 = vunpack.c.l.b16 %v1488
    %v1528 = vunpack.c.l.b16 %v1489
    %v1529 = vunpack.c.l.b16 %v1490
    %v1530 = vunpack.c.l.b16 %v1491
    %v1531 = vpack.c.b16 %v1516, %v1515
    %v1532 = vpack.c.b16 %v1518, %v1517
    %v1533 = vpack.c.b16 %v1520, %v1519
    %v1534 = vpack.c.b16 %v1522, %v1521
    %v1535 = vpack.c.b16 %v1524, %v1523
    %v1536 = vpack.c.b16 %v1526, %v1525
    %v1537 = vpack.c.b16 %v1528, %v1527
    %v1538 = vpack.c.b16 %v1530, %v1529
    %1547 = vmatprep.subr.bf16.mxu0 0
    %1548 = vmatpush1.bf16.msra.mxu0 %v1531
    %1549 = vmatprep.subr.bf16.mxu0 0
    %1550 = vmatpush1.bf16.msra.mxu0 %v1532
    %1551 = vmatprep.subr.bf16.mxu0 0
    %1552 = vmatpush1.bf16.msra.mxu0 %v1533
    %1553 = vmatprep.subr.bf16.mxu0 0
    %1554 = vmatpush1.bf16.msra.mxu0 %v1534
    %1555 = vmatprep.subr.bf16.mxu0 0
    %1556 = vmatpush1.bf16.msra.mxu0 %v1535
    %1557 = vmatprep.subr.bf16.mxu0 0
    %1558 = vmatpush1.bf16.msra.mxu0 %v1536
    %1559 = vmatprep.subr.bf16.mxu0 0
    %1560 = vmatpush1.bf16.msra.mxu0 %v1537
    %1561 = vmatprep.subr.bf16.mxu0 0
    %1562 = vmatpush1.bf16.msra.mxu0 %v1538
    %1563 = vmatprep.subr.bf16.mxu0 0
    %1564 = vmatpush1.bf16.msra.mxu0 0
    %1565 = vmatprep.subr.bf16.mxu0 0
    %1566 = vmatpush1.bf16.msra.mxu0 0
    %1567 = vmatprep.subr.bf16.mxu0 0
    %1568 = vmatpush1.bf16.msra.mxu0 0
    %1569 = vmatprep.subr.bf16.mxu0 0
    %1570 = vmatpush1.bf16.msra.mxu0 0
    %1571 = vmatprep.subr.bf16.mxu0 0
    %1572 = vmatpush1.bf16.msra.mxu0 0
    %1573 = vmatprep.subr.bf16.mxu0 0
    %1574 = vmatpush1.bf16.msra.mxu0 0
    %1575 = vmatprep.subr.bf16.mxu0 0
    %1576 = vmatpush1.bf16.msra.mxu0 0
    %1577 = vmatprep.subr.bf16.mxu0 0
    %1578 = vmatpush1.bf16.msra.mxu0 0
    %1579 = vmatprep.mubr.bf16.mxu0 0
    %1580 = vmatmul.mubr.bf16.gmra.mrb[0].mxu0 %v1475
    %v1581 = vpop.f32.mrb[0].mxu0
    %v1582 = vadd.f32 %v1497, %v1581
    %v1583 = vpop.f32.mrb[0].mxu0
    %v1584 = vpop.f32.mrb[0].mxu0
    %v1585 = vpop.f32.mrb[0].mxu0
    %1586 = vdwg.mxu0
    %v1587 = vmax.f32 %v1582, 0.0
    %v1588 = vpack.c.bf16 %v1587, %v1587
    %v1589 = vld [vmem:[%s8] sm:$0xf]
    %v1590 = vld [vmem:[%s8 + $0x4] sm:$0xf]
    %v1591 = vld [vmem:[%s8 + $0x8] sm:$0xf]
    %v1592 = vld [vmem:[%s8 + $0xc] sm:$0xf]
    %v1593 = vld [vmem:[%s8 + $0x10] sm:$0xf]
    %v1594 = vld [vmem:[%s8 + $0x14] sm:$0xf]
    %v1595 = vld [vmem:[%s8 + $0x18] sm:$0xf]
    %v1596 = vld [vmem:[%s8 + $0x1c] sm:$0xf]
    %v1597 = vld [vmem:[%s8 + $0x20] sm:$0xf]
    %v1598 = vld [vmem:[%s8 + $0x24] sm:$0xf]
    %v1599 = vld [vmem:[%s8 + $0x28] sm:$0xf]
    %v1600 = vld [vmem:[%s8 + $0x2c] sm:$0xf]
    %v1601 = vld [vmem:[%s8 + $0x30] sm:$0xf]
    %v1602 = vld [vmem:[%s8 + $0x34] sm:$0xf]
    %v1603 = vld [vmem:[%s8 + $0x38] sm:$0xf]
    %v1604 = vld [vmem:[%s8 + $0x3c] sm:$0xf]
    %v1605 = vld [vmem:[%s9] sm:$0x1]
    %v1607 = vlaneseq
    %v1608 = vshrl.u32 %v1607, 7
    %v1609 = vsub.s32 0, %v1608
    %v1610 = vrot.slane %v1605, %v1609
    %v1628 = vunpack.c.l.b16 %v1589
    %v1629 = vunpack.c.l.b16 %v1590
    %v1630 = vunpack.c.l.b16 %v1591
    %v1631 = vunpack.c.l.b16 %v1592
    %v1632 = vunpack.c.l.b16 %v1593
    %v1633 = vunpack.c.l.b16 %v1594
    %v1634 = vunpack.c.l.b16 %v1595
    %v1635 = vunpack.c.l.b16 %v1596
    %v1636 = vunpack.c.l.b16 %v1597
    %v1637 = vunpack.c.l.b16 %v1598
    %v1638 = vunpack.c.l.b16 %v1599
    %v1639 = vunpack.c.l.b16 %v1600
    %v1640 = vunpack.c.l.b16 %v1601
    %v1641 = vunpack.c.l.b16 %v1602
    %v1642 = vunpack.c.l.b16 %v1603
    %v1643 = vunpack.c.l.b16 %v1604
    %v1644 = vpack.c.b16 %v1629, %v1628
    %v1645 = vpack.c.b16 %v1631, %v1630
    %v1646 = vpack.c.b16 %v1633, %v1632
    %v1647 = vpack.c.b16 %v1635, %v1634
    %v1648 = vpack.c.b16 %v1637, %v1636
    %v1649 = vpack.c.b16 %v1639, %v1638
    %v1650 = vpack.c.b16 %v1641, %v1640
    %v1651 = vpack.c.b16 %v1643, %v1642
    %1660 = vmatprep.subr.bf16.mxu0 0
    %1661 = vmatpush1.bf16.msra.mxu0 %v1644
    %1662 = vmatprep.subr.bf16.mxu0 0
    %1663 = vmatpush1.bf16.msra.mxu0 %v1645
    %1664 = vmatprep.subr.bf16.mxu0 0
    %1665 = vmatpush1.bf16.msra.mxu0 %v1646
    %1666 = vmatprep.subr.bf16.mxu0 0
    %1667 = vmatpush1.bf16.msra.mxu0 %v1647
    %1668 = vmatprep.subr.bf16.mxu0 0
    %1669 = vmatpush1.bf16.msra.mxu0 %v1648
    %1670 = vmatprep.subr.bf16.mxu0 0
    %1671 = vmatpush1.bf16.msra.mxu0 %v1649
    %1672 = vmatprep.subr.bf16.mxu0 0
    %1673 = vmatpush1.bf16.msra.mxu0 %v1650
    %1674 = vmatprep.subr.bf16.mxu0 0
    %1675 = vmatpush1.bf16.msra.mxu0 %v1651
    %1676 = vmatprep.subr.bf16.mxu0 0
    %1677 = vmatpush1.bf16.msra.mxu0 0
    %1678 = vmatprep.subr.bf16.mxu0 0
    %1679 = vmatpush1.bf16.msra.mxu0 0
    %1680 = vmatprep.subr.bf16.mxu0 0
    %1681 = vmatpush1.bf16.msra.mxu0 0
    %1682 = vmatprep.subr.bf16.mxu0 0
    %1683 = vmatpush1.bf16.msra.mxu0 0
    %1684 = vmatprep.subr.bf16.mxu0 0
    %1685 = vmatpush1.bf16.msra.mxu0 0
    %1686 = vmatprep.subr.bf16.mxu0 0
    %1687 = vmatpush1.bf16.msra.mxu0 0
    %1688 = vmatprep.subr.bf16.mxu0 0
    %1689 = vmatpush1.bf16.msra.mxu0 0
    %1690 = vmatprep.subr.bf16.mxu0 0
    %1691 = vmatpush1.bf16.msra.mxu0 0
    %1692 = vmatprep.mubr.bf16.mxu0 0
    %1693 = vmatmul.mubr.bf16.gmra.mrb[0].mxu0 %v1588
    %v1694 = vpop.f32.mrb[0].mxu0
    %v1695 = vadd.f32 %v1610, %v1694
    %v1696 = vpop.f32.mrb[0].mxu0
    %v1697 = vpop.f32.mrb[0].mxu0
    %v1698 = vpop.f32.mrb[0].mxu0
    %1699 = vdwg.mxu0
    %1700 = vst [vmem:[%s10] sm:$0xff] %v1695
    // Predicated region
    $region46: #{gat_forward.1} parent=1 // pred_check
      _
    $region47: #{gat_forward.1} parent=1 // pred_check_branch
      %1702 = sbr.rel (0) target = $region49
    $region48: #{gat_forward.1} parent=1 // pred_region
      _
    $region49: #{gat_forward.1} parent=1 // pred_fallthru
      _
    // Predicated region
    $region50: #{gat_forward.1} parent=1 // pred_check
      _
    $region51: #{gat_forward.1} parent=1 // pred_check_branch
      %1704 = sbr.rel (0) target = $region53
    $region52: #{gat_forward.1} parent=1 // pred_region
      _
    $region53: #{gat_forward.1} parent=1 // pred_fallthru
      _
    %1705 = vsyncpa [#allocation4], 1

</llo_original>
